<compile_context>
chip_gen: v5e
topology: v5e:2x2
jax: 0.10.0
libtpu: 0.0.40
codegen_flags: <defaults>
</compile_context>

<pallas_src>
import functools

import numpy as np
import jax
import jax.numpy as jnp
from jax.experimental import pallas as pl
from jax.experimental.pallas import tpu as pltpu

LEAK = 0.2
KSIZE = 7


def leaky_relu(x):
    return jnp.where(x > 0, x, LEAK * x)


# ------------------------- fused Pallas kernel -------------------------

def _upsample2(h):
    # Nearest x2 along time (rows): h_up[i] = h[i // 2].  Implemented as
    # U @ h with a 0/1 selection matrix built from 2-D iotas, so no
    # interleaving reshape / lane<->sublane repack is needed.
    T, _ = h.shape
    rows = jax.lax.broadcasted_iota(jnp.int32, (2 * T, T), 0)
    cols = jax.lax.broadcasted_iota(jnp.int32, (2 * T, T), 1)
    d = rows - 2 * cols
    sel = jnp.where((d >= 0) & (d <= 1), 1.0, 0.0).astype(jnp.float32)
    return jnp.dot(sel, h, preferred_element_type=jnp.float32)      # (2T, C)


def _im2col(h, K, pad):
    # h: (T, C) -> xcol: (T, K*C) with xcol[t, k*C + c] = h_padded[t + k, c]
    # ("same" padding of (K-1)//2 zeros on each side, stride 1).
    T, C = h.shape
    z = jnp.zeros((pad, C), jnp.float32)
    xpad = jnp.concatenate([z, h, z], axis=0)                       # (T+K-1, C)
    return jnp.concatenate([xpad[k:k + T, :] for k in range(K)], axis=1)


def _decoder_kernel(x_ref, *refs, n_layers, K):
    out_ref = refs[-1]
    p = refs[:-1]
    pad = (K - 1) // 2

    # ---- LinearOutputStack(C, 3): 3 x (Linear(C, C) + LeakyReLU(0.2)) ----
    h = x_ref[0].astype(jnp.float32)                                # (32, C)
    i = 0
    for _ in range(3):
        w = p[i][...]                                               # (C, C)
        b = p[i + 1][...]                                           # (1, C)
        i += 2
        h = leaky_relu(jnp.dot(h, w, preferred_element_type=jnp.float32) + b)

    # ---- n_layers x [Upsample(x2, nearest) + Conv1d(C,C,7,1,3) + act] ----
    for _ in range(n_layers):
        w = p[i][...]                                               # (K*C, C)
        b = p[i + 1][...]                                           # (1, C)
        i += 2
        h = _upsample2(h)                                           # (2T, C)
        xcol = _im2col(h, K, pad)                                   # (2T, K*C)
        h = leaky_relu(jnp.dot(xcol, w, preferred_element_type=jnp.float32) + b)

    # ---- to_samples: Conv1d(C, 1, 7, 1, 3), lane-dense (1, band) result ----
    w_last = p[i][...]                                              # (8, K*C); row 0 real
    b_last = p[i + 1][...]                                          # (1, 1)
    xcol = _im2col(h, K, pad)                                       # (band, K*C)
    # NT matmul (contract last dims of both) -> time lands on the lane axis.
    y = jax.lax.dot_general(w_last, xcol, (((1,), (1,)), ((), ())),
                            preferred_element_type=jnp.float32)     # (8, band)
    out_ref[0] = (y[0:1, :] + b_last).astype(out_ref.dtype)         # (1, band)


@jax.jit
def conv_band_decoder_forward(x, params):
    B = x.shape[0]
    C = params["band_specific"][0][0].shape[0]
    n_layers = len(params["upsample"])
    band = 32 * (2 ** n_layers)
    K = KSIZE

    x3 = x.reshape(B, 32, C).astype(jnp.float32)                    # free reshape

    def const_spec(shape):
        nd = len(shape)
        return pl.BlockSpec(shape, lambda b, _n=nd: (0,) * _n)

    args = [x3]
    specs = [pl.BlockSpec((1, 32, C), lambda b: (b, 0, 0))]
    for (w, bb) in params["band_specific"]:
        args += [w, bb]
        specs += [const_spec((C, C)), const_spec((1, C))]
    for (w, bb) in params["upsample"]:
        args += [w.reshape(K * C, C), bb]          # (K, Cin, Cout) -> (K*Cin, Cout)
        specs += [const_spec((K * C, C)), const_spec((1, C))]
    wl, bl = params["to_samples"]                  # (K, C, 1), (1, 1)
    w_last = jnp.zeros((8, K * C), jnp.float32).at[0].set(wl.reshape(K * C))
    args += [w_last, bl.reshape(1, 1)]
    specs += [const_spec((8, K * C)), const_spec((1, 1))]

    kern = functools.partial(_decoder_kernel, n_layers=n_layers, K=K)
    # Per-batch working set (activations + im2col + weights) is < 200 KiB, so
    # the full time axis per batch fits VMEM on v5e/v6e/v7x.
    # TODO(synk): if band_size is scaled to >= ~16k samples, tile the time axis
    # with a K-1 halo instead of one whole-band block per batch (v7x 64 MiB VMEM).
    return pl.pallas_call(
        kern,
        out_shape=jax.ShapeDtypeStruct((B, 1, band), jnp.float32),
        grid=(B,),
        in_specs=specs,
        out_specs=pl.BlockSpec((1, 1, band), lambda b: (b, 0, 0)),
        compiler_params=pltpu.CompilerParams(
            dimension_semantics=("parallel",)),     # batch across v7x TensorCores
    )(*args)


# ------------------------- params -------------------------

def init_params(key, channels, band_size):
    n_layers = int(np.log2(band_size) - np.log2(32))
    keys = jax.random.split(key, 3 + n_layers + 1)

    def lin(k):
        kw, kb = jax.random.split(k)
        w = jax.random.normal(kw, (channels, channels), jnp.float32)
        w = w * (1.0 / np.sqrt(channels))
        b = jax.random.normal(kb, (1, channels), jnp.float32) * 0.01
        return (w, b)

    def conv(k, cin, cout, K=KSIZE):
        kw, kb = jax.random.split(k)
        w = jax.random.normal(kw, (K, cin, cout), jnp.float32)
        w = w * (1.0 / np.sqrt(cin * K))
        b = jax.random.normal(kb, (1, cout), jnp.float32) * 0.01
        return (w, b)

    return {
        "band_specific": tuple(lin(keys[i]) for i in range(3)),
        "upsample": tuple(conv(keys[3 + i], channels, channels)
                          for i in range(n_layers)),
        "to_samples": conv(keys[3 + n_layers], channels, 1),
    }


# ------------------------- pure-JAX reference (mirrors PyTorch NCW) ---------

def reference_forward(x, params):
    B = x.shape[0]
    C = params["band_specific"][0][0].shape[0]
    h = x.reshape(B, 32, C)
    for (w, b) in params["band_specific"]:
        h = leaky_relu(h @ w + b[0])
    h = jnp.transpose(h, (0, 2, 1))                                 # (B, C, 32)

    def conv_ncw(h, w, b):
        wt = jnp.transpose(w, (2, 1, 0))                            # (Cout, Cin, K)
        y = jax.lax.conv_general_dilated(
            h, wt, window_strides=(1,), padding=[(3, 3)],
            dimension_numbers=("NCH", "OIH", "NCH"))
        return y + b[0][None, :, None]

    for (w, b) in params["upsample"]:
        h = jnp.repeat(h, 2, axis=2)                                # nearest x2
        h = leaky_relu(conv_ncw(h, w, b))
    w, b = params["to_samples"]
    return conv_ncw(h, w, b)                                        # (B, 1, band)


if __name__ == "__main__":
    channels, band_size, batch = 32, 128, 2                         # n_layers = 2
    key = jax.random.PRNGKey(0)
    kx, kp = jax.random.split(key)
    params = init_params(kp, channels, band_size)
    x = jax.random.normal(kx, (batch, 32 * channels), jnp.float32)

    out = conv_band_decoder_forward(x, params)
    out = jax.block_until_ready(out)
    assert out.shape == (batch, 1, band_size)

    ref = reference_forward(x, params)
    np.testing.assert_allclose(np.asarray(out), np.asarray(ref),
                               rtol=2e-4, atol=2e-4)
    print("KERNEL_OK")
</pallas_src>

<mosaic_0001>
module attributes {stable_mosaic.version = 11 : i64} {
  func.func @_decoder_kernel(%arg0: i32, %arg1: memref<1x32x32xf32, #tpu.memory_space<vmem>>, %arg2: memref<32x32xf32, #tpu.memory_space<vmem>>, %arg3: memref<1x32xf32, #tpu.memory_space<vmem>>, %arg4: memref<32x32xf32, #tpu.memory_space<vmem>>, %arg5: memref<1x32xf32, #tpu.memory_space<vmem>>, %arg6: memref<32x32xf32, #tpu.memory_space<vmem>>, %arg7: memref<1x32xf32, #tpu.memory_space<vmem>>, %arg8: memref<224x32xf32, #tpu.memory_space<vmem>>, %arg9: memref<1x32xf32, #tpu.memory_space<vmem>>, %arg10: memref<224x32xf32, #tpu.memory_space<vmem>>, %arg11: memref<1x32xf32, #tpu.memory_space<vmem>>, %arg12: memref<8x224xf32, #tpu.memory_space<vmem>>, %arg13: memref<1x1xf32, #tpu.memory_space<vmem>>, %arg14: memref<1x1x128xf32, #tpu.memory_space<vmem>>) attributes {dimension_semantics = [#tpu.dimension_semantics<parallel>], iteration_bounds = array<i64: 2>, scalar_prefetch = 0 : i64, scratch_operands = 0 : i64, tpu.core_type = #tpu.core_type<tc>, window_params = [{transform_indices = @transform_0, window_bounds = array<i64: 1, 32, 32>}, {pipeline_mode = #tpu.pipeline_mode<synchronous>, transform_indices = @transform_1, window_bounds = array<i64: 32, 32>}, {pipeline_mode = #tpu.pipeline_mode<synchronous>, transform_indices = @transform_2, window_bounds = array<i64: 1, 32>}, {pipeline_mode = #tpu.pipeline_mode<synchronous>, transform_indices = @transform_3, window_bounds = array<i64: 32, 32>}, {pipeline_mode = #tpu.pipeline_mode<synchronous>, transform_indices = @transform_4, window_bounds = array<i64: 1, 32>}, {pipeline_mode = #tpu.pipeline_mode<synchronous>, transform_indices = @transform_5, window_bounds = array<i64: 32, 32>}, {pipeline_mode = #tpu.pipeline_mode<synchronous>, transform_indices = @transform_6, window_bounds = array<i64: 1, 32>}, {pipeline_mode = #tpu.pipeline_mode<synchronous>, transform_indices = @transform_7, window_bounds = array<i64: 224, 32>}, {pipeline_mode = #tpu.pipeline_mode<synchronous>, transform_indices = @transform_8, window_bounds = array<i64: 1, 32>}, {pipeline_mode = #tpu.pipeline_mode<synchronous>, transform_indices = @transform_9, window_bounds = array<i64: 224, 32>}, {pipeline_mode = #tpu.pipeline_mode<synchronous>, transform_indices = @transform_10, window_bounds = array<i64: 1, 32>}, {pipeline_mode = #tpu.pipeline_mode<synchronous>, transform_indices = @transform_11, window_bounds = array<i64: 8, 224>}, {pipeline_mode = #tpu.pipeline_mode<synchronous>, transform_indices = @transform_12, window_bounds = array<i64: 1, 1>}, {transform_indices = @transform_13, window_bounds = array<i64: 1, 1, 128>}]} {
    %c0 = arith.constant 0 : index
    %c0_0 = arith.constant 0 : index
    %c0_1 = arith.constant 0 : index
    %0 = vector.load %arg1[%c0, %c0_0, %c0_1] : memref<1x32x32xf32, #tpu.memory_space<vmem>>, vector<1x32x32xf32>
    %1 = vector.shape_cast %0 : vector<1x32x32xf32> to vector<32x32xf32>
    %c0_2 = arith.constant 0 : index
    %c0_3 = arith.constant 0 : index
    %2 = vector.load %arg2[%c0_2, %c0_3] : memref<32x32xf32, #tpu.memory_space<vmem>>, vector<32x32xf32>
    %c0_4 = arith.constant 0 : index
    %c0_5 = arith.constant 0 : index
    %3 = vector.load %arg3[%c0_4, %c0_5] : memref<1x32xf32, #tpu.memory_space<vmem>>, vector<1x32xf32>
    %cst = arith.constant dense<0.000000e+00> : vector<32x32xf32>
    %4 = tpu.matmul %1, %2, %cst {dimension_numbers = #tpu.dot_dimension_numbers<[1], [0], [0], [1], [0, 0, 1, 1], [], []>} : vector<32x32xf32>, vector<32x32xf32>, vector<32x32xf32> -> vector<32x32xf32>
    %5 = vector.broadcast %3 : vector<1x32xf32> to vector<32x32xf32>
    %6 = arith.addf %4, %5 : vector<32x32xf32>
    %cst_6 = arith.constant 0.000000e+00 : f32
    %7 = vector.broadcast %cst_6 : f32 to vector<32x32xf32>
    %8 = arith.cmpf ogt, %6, %7 : vector<32x32xf32>
    %cst_7 = arith.constant 2.000000e-01 : f32
    %9 = vector.broadcast %cst_7 : f32 to vector<32x32xf32>
    %10 = arith.mulf %9, %6 : vector<32x32xf32>
    %11 = arith.select %8, %6, %10 : vector<32x32xi1>, vector<32x32xf32>
    %c0_8 = arith.constant 0 : index
    %c0_9 = arith.constant 0 : index
    %12 = vector.load %arg4[%c0_8, %c0_9] : memref<32x32xf32, #tpu.memory_space<vmem>>, vector<32x32xf32>
    %c0_10 = arith.constant 0 : index
    %c0_11 = arith.constant 0 : index
    %13 = vector.load %arg5[%c0_10, %c0_11] : memref<1x32xf32, #tpu.memory_space<vmem>>, vector<1x32xf32>
    %cst_12 = arith.constant dense<0.000000e+00> : vector<32x32xf32>
    %14 = tpu.matmul %11, %12, %cst_12 {dimension_numbers = #tpu.dot_dimension_numbers<[1], [0], [0], [1], [0, 0, 1, 1], [], []>} : vector<32x32xf32>, vector<32x32xf32>, vector<32x32xf32> -> vector<32x32xf32>
    %15 = vector.broadcast %13 : vector<1x32xf32> to vector<32x32xf32>
    %16 = arith.addf %14, %15 : vector<32x32xf32>
    %cst_13 = arith.constant 0.000000e+00 : f32
    %17 = vector.broadcast %cst_13 : f32 to vector<32x32xf32>
    %18 = arith.cmpf ogt, %16, %17 : vector<32x32xf32>
    %cst_14 = arith.constant 2.000000e-01 : f32
    %19 = vector.broadcast %cst_14 : f32 to vector<32x32xf32>
    %20 = arith.mulf %19, %16 : vector<32x32xf32>
    %21 = arith.select %18, %16, %20 : vector<32x32xi1>, vector<32x32xf32>
    %c0_15 = arith.constant 0 : index
    %c0_16 = arith.constant 0 : index
    %22 = vector.load %arg6[%c0_15, %c0_16] : memref<32x32xf32, #tpu.memory_space<vmem>>, vector<32x32xf32>
    %c0_17 = arith.constant 0 : index
    %c0_18 = arith.constant 0 : index
    %23 = vector.load %arg7[%c0_17, %c0_18] : memref<1x32xf32, #tpu.memory_space<vmem>>, vector<1x32xf32>
    %cst_19 = arith.constant dense<0.000000e+00> : vector<32x32xf32>
    %24 = tpu.matmul %21, %22, %cst_19 {dimension_numbers = #tpu.dot_dimension_numbers<[1], [0], [0], [1], [0, 0, 1, 1], [], []>} : vector<32x32xf32>, vector<32x32xf32>, vector<32x32xf32> -> vector<32x32xf32>
    %25 = vector.broadcast %23 : vector<1x32xf32> to vector<32x32xf32>
    %26 = arith.addf %24, %25 : vector<32x32xf32>
    %cst_20 = arith.constant 0.000000e+00 : f32
    %27 = vector.broadcast %cst_20 : f32 to vector<32x32xf32>
    %28 = arith.cmpf ogt, %26, %27 : vector<32x32xf32>
    %cst_21 = arith.constant 2.000000e-01 : f32
    %29 = vector.broadcast %cst_21 : f32 to vector<32x32xf32>
    %30 = arith.mulf %29, %26 : vector<32x32xf32>
    %31 = arith.select %28, %26, %30 : vector<32x32xi1>, vector<32x32xf32>
    %c0_22 = arith.constant 0 : index
    %c0_23 = arith.constant 0 : index
    %32 = vector.load %arg8[%c0_22, %c0_23] : memref<224x32xf32, #tpu.memory_space<vmem>>, vector<224x32xf32>
    %c0_24 = arith.constant 0 : index
    %c0_25 = arith.constant 0 : index
    %33 = vector.load %arg9[%c0_24, %c0_25] : memref<1x32xf32, #tpu.memory_space<vmem>>, vector<1x32xf32>
    %34 = tpu.iota {dimensions = array<i32: 0>} : vector<64x32xi32>
    %35 = tpu.iota {dimensions = array<i32: 1>} : vector<64x32xi32>
    %c2_i32 = arith.constant 2 : i32
    %36 = vector.broadcast %c2_i32 : i32 to vector<64x32xi32>
    %37 = arith.muli %36, %35 : vector<64x32xi32>
    %38 = arith.subi %34, %37 : vector<64x32xi32>
    %c0_i32 = arith.constant 0 : i32
    %39 = vector.broadcast %c0_i32 : i32 to vector<64x32xi32>
    %40 = arith.cmpi sge, %38, %39 : vector<64x32xi32>
    %c1_i32 = arith.constant 1 : i32
    %41 = vector.broadcast %c1_i32 : i32 to vector<64x32xi32>
    %42 = arith.cmpi sle, %38, %41 : vector<64x32xi32>
    %43 = arith.andi %40, %42 : vector<64x32xi1>
    %cst_26 = arith.constant 1.000000e+00 : f32
    %cst_27 = arith.constant 0.000000e+00 : f32
    %44 = vector.broadcast %cst_26 : f32 to vector<64x32xf32>
    %45 = vector.broadcast %cst_27 : f32 to vector<64x32xf32>
    %46 = arith.select %43, %44, %45 : vector<64x32xi1>, vector<64x32xf32>
    %cst_28 = arith.constant dense<0.000000e+00> : vector<64x32xf32>
    %47 = tpu.matmul %46, %31, %cst_28 {dimension_numbers = #tpu.dot_dimension_numbers<[1], [0], [0], [1], [0, 0, 1, 1], [], []>} : vector<64x32xf32>, vector<32x32xf32>, vector<64x32xf32> -> vector<64x32xf32>
    %cst_29 = arith.constant 0.000000e+00 : f32
    %48 = vector.broadcast %cst_29 : f32 to vector<3x32xf32>
    %49 = tpu.concatenate %48, %47, %48 in 0 : vector<3x32xf32>, vector<64x32xf32>, vector<3x32xf32> -> vector<70x32xf32>
    %50 = vector.extract_strided_slice %49 {offsets = [0, 0], sizes = [64, 32], strides = [1, 1]} : vector<70x32xf32> to vector<64x32xf32>
    %51 = vector.extract_strided_slice %49 {offsets = [1, 0], sizes = [64, 32], strides = [1, 1]} : vector<70x32xf32> to vector<64x32xf32>
    %52 = vector.extract_strided_slice %49 {offsets = [2, 0], sizes = [64, 32], strides = [1, 1]} : vector<70x32xf32> to vector<64x32xf32>
    %53 = vector.extract_strided_slice %49 {offsets = [3, 0], sizes = [64, 32], strides = [1, 1]} : vector<70x32xf32> to vector<64x32xf32>
    %54 = vector.extract_strided_slice %49 {offsets = [4, 0], sizes = [64, 32], strides = [1, 1]} : vector<70x32xf32> to vector<64x32xf32>
    %55 = vector.extract_strided_slice %49 {offsets = [5, 0], sizes = [64, 32], strides = [1, 1]} : vector<70x32xf32> to vector<64x32xf32>
    %56 = vector.extract_strided_slice %49 {offsets = [6, 0], sizes = [64, 32], strides = [1, 1]} : vector<70x32xf32> to vector<64x32xf32>
    %57 = tpu.concatenate %50, %51, %52, %53, %54, %55, %56 in 1 : vector<64x32xf32>, vector<64x32xf32>, vector<64x32xf32>, vector<64x32xf32>, vector<64x32xf32>, vector<64x32xf32>, vector<64x32xf32> -> vector<64x224xf32>
    %cst_30 = arith.constant dense<0.000000e+00> : vector<64x32xf32>
    %58 = tpu.matmul %57, %32, %cst_30 {dimension_numbers = #tpu.dot_dimension_numbers<[1], [0], [0], [1], [0, 0, 1, 1], [], []>} : vector<64x224xf32>, vector<224x32xf32>, vector<64x32xf32> -> vector<64x32xf32>
    %59 = vector.broadcast %33 : vector<1x32xf32> to vector<64x32xf32>
    %60 = arith.addf %58, %59 : vector<64x32xf32>
    %cst_31 = arith.constant 0.000000e+00 : f32
    %61 = vector.broadcast %cst_31 : f32 to vector<64x32xf32>
    %62 = arith.cmpf ogt, %60, %61 : vector<64x32xf32>
    %cst_32 = arith.constant 2.000000e-01 : f32
    %63 = vector.broadcast %cst_32 : f32 to vector<64x32xf32>
    %64 = arith.mulf %63, %60 : vector<64x32xf32>
    %65 = arith.select %62, %60, %64 : vector<64x32xi1>, vector<64x32xf32>
    %c0_33 = arith.constant 0 : index
    %c0_34 = arith.constant 0 : index
    %66 = vector.load %arg10[%c0_33, %c0_34] : memref<224x32xf32, #tpu.memory_space<vmem>>, vector<224x32xf32>
    %c0_35 = arith.constant 0 : index
    %c0_36 = arith.constant 0 : index
    %67 = vector.load %arg11[%c0_35, %c0_36] : memref<1x32xf32, #tpu.memory_space<vmem>>, vector<1x32xf32>
    %68 = tpu.iota {dimensions = array<i32: 0>} : vector<128x64xi32>
    %69 = tpu.iota {dimensions = array<i32: 1>} : vector<128x64xi32>
    %c2_i32_37 = arith.constant 2 : i32
    %70 = vector.broadcast %c2_i32_37 : i32 to vector<128x64xi32>
    %71 = arith.muli %70, %69 : vector<128x64xi32>
    %72 = arith.subi %68, %71 : vector<128x64xi32>
    %c0_i32_38 = arith.constant 0 : i32
    %73 = vector.broadcast %c0_i32_38 : i32 to vector<128x64xi32>
    %74 = arith.cmpi sge, %72, %73 : vector<128x64xi32>
    %c1_i32_39 = arith.constant 1 : i32
    %75 = vector.broadcast %c1_i32_39 : i32 to vector<128x64xi32>
    %76 = arith.cmpi sle, %72, %75 : vector<128x64xi32>
    %77 = arith.andi %74, %76 : vector<128x64xi1>
    %cst_40 = arith.constant 1.000000e+00 : f32
    %cst_41 = arith.constant 0.000000e+00 : f32
    %78 = vector.broadcast %cst_40 : f32 to vector<128x64xf32>
    %79 = vector.broadcast %cst_41 : f32 to vector<128x64xf32>
    %80 = arith.select %77, %78, %79 : vector<128x64xi1>, vector<128x64xf32>
    %cst_42 = arith.constant dense<0.000000e+00> : vector<128x32xf32>
    %81 = tpu.matmul %80, %65, %cst_42 {dimension_numbers = #tpu.dot_dimension_numbers<[1], [0], [0], [1], [0, 0, 1, 1], [], []>} : vector<128x64xf32>, vector<64x32xf32>, vector<128x32xf32> -> vector<128x32xf32>
    %cst_43 = arith.constant 0.000000e+00 : f32
    %82 = vector.broadcast %cst_43 : f32 to vector<3x32xf32>
    %83 = tpu.concatenate %82, %81, %82 in 0 : vector<3x32xf32>, vector<128x32xf32>, vector<3x32xf32> -> vector<134x32xf32>
    %84 = vector.extract_strided_slice %83 {offsets = [0, 0], sizes = [128, 32], strides = [1, 1]} : vector<134x32xf32> to vector<128x32xf32>
    %85 = vector.extract_strided_slice %83 {offsets = [1, 0], sizes = [128, 32], strides = [1, 1]} : vector<134x32xf32> to vector<128x32xf32>
    %86 = vector.extract_strided_slice %83 {offsets = [2, 0], sizes = [128, 32], strides = [1, 1]} : vector<134x32xf32> to vector<128x32xf32>
    %87 = vector.extract_strided_slice %83 {offsets = [3, 0], sizes = [128, 32], strides = [1, 1]} : vector<134x32xf32> to vector<128x32xf32>
    %88 = vector.extract_strided_slice %83 {offsets = [4, 0], sizes = [128, 32], strides = [1, 1]} : vector<134x32xf32> to vector<128x32xf32>
    %89 = vector.extract_strided_slice %83 {offsets = [5, 0], sizes = [128, 32], strides = [1, 1]} : vector<134x32xf32> to vector<128x32xf32>
    %90 = vector.extract_strided_slice %83 {offsets = [6, 0], sizes = [128, 32], strides = [1, 1]} : vector<134x32xf32> to vector<128x32xf32>
    %91 = tpu.concatenate %84, %85, %86, %87, %88, %89, %90 in 1 : vector<128x32xf32>, vector<128x32xf32>, vector<128x32xf32>, vector<128x32xf32>, vector<128x32xf32>, vector<128x32xf32>, vector<128x32xf32> -> vector<128x224xf32>
    %cst_44 = arith.constant dense<0.000000e+00> : vector<128x32xf32>
    %92 = tpu.matmul %91, %66, %cst_44 {dimension_numbers = #tpu.dot_dimension_numbers<[1], [0], [0], [1], [0, 0, 1, 1], [], []>} : vector<128x224xf32>, vector<224x32xf32>, vector<128x32xf32> -> vector<128x32xf32>
    %93 = vector.broadcast %67 : vector<1x32xf32> to vector<128x32xf32>
    %94 = arith.addf %92, %93 : vector<128x32xf32>
    %cst_45 = arith.constant 0.000000e+00 : f32
    %95 = vector.broadcast %cst_45 : f32 to vector<128x32xf32>
    %96 = arith.cmpf ogt, %94, %95 : vector<128x32xf32>
    %cst_46 = arith.constant 2.000000e-01 : f32
    %97 = vector.broadcast %cst_46 : f32 to vector<128x32xf32>
    %98 = arith.mulf %97, %94 : vector<128x32xf32>
    %99 = arith.select %96, %94, %98 : vector<128x32xi1>, vector<128x32xf32>
    %c0_47 = arith.constant 0 : index
    %c0_48 = arith.constant 0 : index
    %100 = vector.load %arg12[%c0_47, %c0_48] : memref<8x224xf32, #tpu.memory_space<vmem>>, vector<8x224xf32>
    %c0_49 = arith.constant 0 : index
    %c0_50 = arith.constant 0 : index
    %101 = vector.load %arg13[%c0_49, %c0_50] : memref<1x1xf32, #tpu.memory_space<vmem>>, vector<1x1xf32>
    %cst_51 = arith.constant 0.000000e+00 : f32
    %102 = vector.broadcast %cst_51 : f32 to vector<3x32xf32>
    %103 = tpu.concatenate %102, %99, %102 in 0 : vector<3x32xf32>, vector<128x32xf32>, vector<3x32xf32> -> vector<134x32xf32>
    %104 = vector.extract_strided_slice %103 {offsets = [0, 0], sizes = [128, 32], strides = [1, 1]} : vector<134x32xf32> to vector<128x32xf32>
    %105 = vector.extract_strided_slice %103 {offsets = [1, 0], sizes = [128, 32], strides = [1, 1]} : vector<134x32xf32> to vector<128x32xf32>
    %106 = vector.extract_strided_slice %103 {offsets = [2, 0], sizes = [128, 32], strides = [1, 1]} : vector<134x32xf32> to vector<128x32xf32>
    %107 = vector.extract_strided_slice %103 {offsets = [3, 0], sizes = [128, 32], strides = [1, 1]} : vector<134x32xf32> to vector<128x32xf32>
    %108 = vector.extract_strided_slice %103 {offsets = [4, 0], sizes = [128, 32], strides = [1, 1]} : vector<134x32xf32> to vector<128x32xf32>
    %109 = vector.extract_strided_slice %103 {offsets = [5, 0], sizes = [128, 32], strides = [1, 1]} : vector<134x32xf32> to vector<128x32xf32>
    %110 = vector.extract_strided_slice %103 {offsets = [6, 0], sizes = [128, 32], strides = [1, 1]} : vector<134x32xf32> to vector<128x32xf32>
    %111 = tpu.concatenate %104, %105, %106, %107, %108, %109, %110 in 1 : vector<128x32xf32>, vector<128x32xf32>, vector<128x32xf32>, vector<128x32xf32>, vector<128x32xf32>, vector<128x32xf32>, vector<128x32xf32> -> vector<128x224xf32>
    %cst_52 = arith.constant dense<0.000000e+00> : vector<8x128xf32>
    %112 = tpu.matmul %100, %111, %cst_52 {dimension_numbers = #tpu.dot_dimension_numbers<[1], [1], [0], [0], [0, 0, 1, 0], [], []>} : vector<8x224xf32>, vector<128x224xf32>, vector<8x128xf32> -> vector<8x128xf32>
    %113 = vector.extract_strided_slice %112 {offsets = [0, 0], sizes = [1, 128], strides = [1, 1]} : vector<8x128xf32> to vector<1x128xf32>
    %114 = vector.broadcast %101 : vector<1x1xf32> to vector<1x128xf32>
    %115 = arith.addf %113, %114 : vector<1x128xf32>
    %c0_53 = arith.constant 0 : index
    %c0_54 = arith.constant 0 : index
    %c0_55 = arith.constant 0 : index
    %116 = vector.load %arg14[%c0_53, %c0_54, %c0_55] : memref<1x1x128xf32, #tpu.memory_space<vmem>>, vector<1x1x128xf32>
    %117 = vector.shape_cast %116 : vector<1x1x128xf32> to vector<1x128xf32>
    %118 = vector.shape_cast %115 : vector<1x128xf32> to vector<1x1x128xf32>
    tpu.vector_store %arg14[%c0_53, %c0_54, %c0_55], %118 {strides = array<i32>} : memref<1x1x128xf32, #tpu.memory_space<vmem>>, vector<1x1x128xf32>,
    return
  }
  func.func @transform_0(%arg0: i32) -> (i32, i32, i32) {
    %c0_i32 = arith.constant 0 : i32
    %c0_i32_0 = arith.constant 0 : i32
    %c0_i32_1 = arith.constant 0 : i32
    return %arg0, %c0_i32, %c0_i32_0 : i32, i32, i32
  }
  func.func @transform_1(%arg0: i32) -> (i32, i32) {
    %c0_i32 = arith.constant 0 : i32
    %c0_i32_0 = arith.constant 0 : i32
    %c0_i32_1 = arith.constant 0 : i32
    return %c0_i32, %c0_i32_0 : i32, i32
  }
  func.func @transform_2(%arg0: i32) -> (i32, i32) {
    %c0_i32 = arith.constant 0 : i32
    %c0_i32_0 = arith.constant 0 : i32
    %c0_i32_1 = arith.constant 0 : i32
    return %c0_i32, %c0_i32_0 : i32, i32
  }
  func.func @transform_3(%arg0: i32) -> (i32, i32) {
    %c0_i32 = arith.constant 0 : i32
    %c0_i32_0 = arith.constant 0 : i32
    %c0_i32_1 = arith.constant 0 : i32
    return %c0_i32, %c0_i32_0 : i32, i32
  }
  func.func @transform_4(%arg0: i32) -> (i32, i32) {
    %c0_i32 = arith.constant 0 : i32
    %c0_i32_0 = arith.constant 0 : i32
    %c0_i32_1 = arith.constant 0 : i32
    return %c0_i32, %c0_i32_0 : i32, i32
  }
  func.func @transform_5(%arg0: i32) -> (i32, i32) {
    %c0_i32 = arith.constant 0 : i32
    %c0_i32_0 = arith.constant 0 : i32
    %c0_i32_1 = arith.constant 0 : i32
    return %c0_i32, %c0_i32_0 : i32, i32
  }
  func.func @transform_6(%arg0: i32) -> (i32, i32) {
    %c0_i32 = arith.constant 0 : i32
    %c0_i32_0 = arith.constant 0 : i32
    %c0_i32_1 = arith.constant 0 : i32
    return %c0_i32, %c0_i32_0 : i32, i32
  }
  func.func @transform_7(%arg0: i32) -> (i32, i32) {
    %c0_i32 = arith.constant 0 : i32
    %c0_i32_0 = arith.constant 0 : i32
    %c0_i32_1 = arith.constant 0 : i32
    return %c0_i32, %c0_i32_0 : i32, i32
  }
  func.func @transform_8(%arg0: i32) -> (i32, i32) {
    %c0_i32 = arith.constant 0 : i32
    %c0_i32_0 = arith.constant 0 : i32
    %c0_i32_1 = arith.constant 0 : i32
    return %c0_i32, %c0_i32_0 : i32, i32
  }
  func.func @transform_9(%arg0: i32) -> (i32, i32) {
    %c0_i32 = arith.constant 0 : i32
    %c0_i32_0 = arith.constant 0 : i32
    %c0_i32_1 = arith.constant 0 : i32
    return %c0_i32, %c0_i32_0 : i32, i32
  }
  func.func @transform_10(%arg0: i32) -> (i32, i32) {
    %c0_i32 = arith.constant 0 : i32
    %c0_i32_0 = arith.constant 0 : i32
    %c0_i32_1 = arith.constant 0 : i32
    return %c0_i32, %c0_i32_0 : i32, i32
  }
  func.func @transform_11(%arg0: i32) -> (i32, i32) {
    %c0_i32 = arith.constant 0 : i32
    %c0_i32_0 = arith.constant 0 : i32
    %c0_i32_1 = arith.constant 0 : i32
    return %c0_i32, %c0_i32_0 : i32, i32
  }
  func.func @transform_12(%arg0: i32) -> (i32, i32) {
    %c0_i32 = arith.constant 0 : i32
    %c0_i32_0 = arith.constant 0 : i32
    %c0_i32_1 = arith.constant 0 : i32
    return %c0_i32, %c0_i32_0 : i32, i32
  }
  func.func @transform_13(%arg0: i32) -> (i32, i32, i32) {
    %c0_i32 = arith.constant 0 : i32
    %c0_i32_0 = arith.constant 0 : i32
    %c0_i32_1 = arith.constant 0 : i32
    return %arg0, %c0_i32, %c0_i32_0 : i32, i32, i32
  }
}

</mosaic_0001>

<llo_original>
// kernel: conv_band_decoder_forward.1
$region0: #{conv_band_decoder_forward.1}
  #allocation0 [shape = 'u32[]', space=smem, size = 0x4, offset = 0x4, fixed_abs, tag = 'smem constant byte address 0x4 - core index']
  #allocation1 [shape = 'u32[72,128]{1,0:T(1,128)}', space=vmem, size = 0x9000, scoped, tag = 'internal scratch']
  #allocation2 [shape = 'f32[1,1]{1,0:T(1,128)S(1)}', space=vmem, size = 0x200, scoped, tag = 'scoped memory for conv_band_decoder_forward.1']
  %s0 = inlined_call_operand.vmem [shape: f32[2,32,32], index: 0, kind: input, shape index: {}]
  %s1 = inlined_call_operand.vmem [shape: f32[32,32], index: 1, kind: input, shape index: {}]
  %s2 = inlined_call_operand.vmem [shape: f32[1,32], index: 2, kind: input, shape index: {}]
  %s3 = inlined_call_operand.vmem [shape: f32[32,32], index: 3, kind: input, shape index: {}]
  %s4 = inlined_call_operand.vmem [shape: f32[1,32], index: 4, kind: input, shape index: {}]
  %s5 = inlined_call_operand.vmem [shape: f32[32,32], index: 5, kind: input, shape index: {}]
  %s6 = inlined_call_operand.vmem [shape: f32[1,32], index: 6, kind: input, shape index: {}]
  %s7 = inlined_call_operand.hbm [shape: f32[224,32], index: 7, kind: input, shape index: {}]
  %s8 = inlined_call_operand.vmem [shape: f32[1,32], index: 8, kind: input, shape index: {}]
  %s9 = inlined_call_operand.hbm [shape: f32[224,32], index: 9, kind: input, shape index: {}]
  %s10 = inlined_call_operand.vmem [shape: f32[1,32], index: 10, kind: input, shape index: {}]
  %s11 = inlined_call_operand.vmem [shape: f32[8,224], index: 11, kind: input, shape index: {}]
  %s12 = inlined_call_operand.<no memory space> [shape: f32[1,1], index: 12, kind: input, shape index: {}]
  %s13 = inlined_call_operand.hbm [shape: f32[2,1,128], index: 13, kind: output, shape index: {}]
  %s14 = sld [smem:[#allocation0]]
  $region93: #{conv_band_decoder_forward.1} parent=0
    _
  %s16 = ssub.s32 1, %s14
  %s17 = scalar_select 0, %s16, %s14
  %v18 = vstv %s12
  %19 = vst [vmem:[#allocation2] sm:$0x1] %v18
  $region1: #{conv_band_decoder_forward.1} parent=0
    #allocation3 [shape = 'u8[114688]{0}', space=vmem, size = 0x1c000, scoped, tag = 'input window, operand 7, single buffered']
    #allocation4 [shape = 's32[2]{0}', space=sflag, size = 0x8, scoped, tag = 'scoped memory for conv_band_decoder_forward.1']
    #allocation5 [shape = 's32[2]{0}', space=sflag, size = 0x8, scoped, tag = 'scoped memory for conv_band_decoder_forward.1']
    #allocation6 [shape = 'u8[114688]{0}', space=vmem, size = 0x1c000, scoped, tag = 'input window, operand 9, single buffered']
    #allocation7 [shape = 's32[1]{0}', space=sflag, size = 0x4, scoped, tag = 'scoped memory for conv_band_decoder_forward.1']
    #allocation8 [shape = 'u8[1024]{0}', space=vmem, size = 0x400, scoped, tag = 'output window, operand 0']
    %20 = vsyncpa [#allocation4], 0
    %21 = vsyncpa [#allocation7], 0
    %22 = vsyncpa [#allocation5], 0
    %s23 = scalar_lea.sflag [#allocation5], 1
    %24 = vsyncpa %s23, 0
    loop: start=0, step=1, limit=4
    $region2: #{conv_band_decoder_forward.1} parent=1 // loop_pre_header
      _
    $region3: #{conv_band_decoder_forward.1} parent=1 // loop_header
      %s26 = sphi 0, %s30
      %p27 = scmp.ge.s32.totalorder %s26, 4
      %s36 = sphi 0, %s38
      %s39 = sphi 0, %s36
      %s40 = sphi 0, %s39
      %s56 = sphi 0, %s40
      %s60 = sphi 0, %s60
      %s62 = sphi 0, %s60
      %s63 = sphi 0, %s62
      %s77 = sphi 0, %s63
      %s81 = sphi 0, %s81
      %s83 = sphi 0, %s81
      %s84 = sphi 0, %s83
      %s98 = sphi 0, %s84
      %s102 = sphi 0, %s102
      %s104 = sphi 0, %s102
      %s105 = sphi 0, %s104
      %s119 = sphi 0, %s105
      %s123 = sphi 0, %s123
      %s125 = sphi 0, %s123
      %s126 = sphi 0, %s125
      %s140 = sphi 0, %s126
      %s144 = sphi 0, %s144
      %s146 = sphi 0, %s144
      %s147 = sphi 0, %s146
      %s161 = sphi 0, %s147
      %s165 = sphi 0, %s165
      %s167 = sphi 0, %s165
      %s168 = sphi 0, %s167
      %s182 = sphi 0, %s168
      %s186 = sphi 0, %s186
      %s188 = sphi 0, %s186
      %s189 = sphi 0, %s188
      %s203 = sphi 0, %s189
      %s207 = sphi 0, %s207
      %s209 = sphi 0, %s207
      %s210 = sphi 0, %s209
      %s224 = sphi 0, %s210
      %s228 = sphi 0, %s228
      %s230 = sphi 0, %s228
      %s231 = sphi 0, %s230
      %s245 = sphi 0, %s231
      %s249 = sphi 0, %s249
      %s251 = sphi 0, %s249
      %s252 = sphi 0, %s251
      %s266 = sphi 0, %s252
      %s270 = sphi 0, %s270
      %s272 = sphi 0, %s270
      %s273 = sphi 0, %s272
      %s287 = sphi 0, %s273
      %s291 = sphi 0, %s291
      %s293 = sphi 0, %s291
      %s294 = sphi 0, %s293
      %s308 = sphi 0, %s294
      %s314 = sphi 0, %s316
      %s317 = sphi 0, %s314
      %s318 = sphi 0, %s317
      %s334 = sphi 0, %s318
    $region4: #{conv_band_decoder_forward.1} parent=1 // loop_header_branch
      %29 = sbr.rel (%p27) target = $region8
    $region5: #{conv_band_decoder_forward.1} parent=1 // loop_body
      %s31 = ssub.s32 %s26, 1
      %s32 = ssub.s32 %s26, 2
      %s33 = sadd.s32 %s26, 1
      %s34 = ssub.s32 %s26, %s33
      %p35 = scmp.eq.s32.totalorder %s34, 0
      %s37 = sadd.s32 %s36, 1
      %s38 = scalar_select %p35, %s36, %s37
      %p41 = pneg %p35
      %p42 = scmp.eq.s32.totalorder %s26, 1
      %p43 = por %p41, %p42
      %p44 = scmp.ne.s32.totalorder %s36, %s39
      %p45 = scmp.eq.s32.totalorder %s26, 0
      %p46 = por %p44, %p45
      %p47 = scmp.ne.s32.totalorder %s36, %s39
      %p48 = scmp.eq.s32.totalorder %s31, 1
      %p49 = por %p47, %p48
      %p50 = scmp.ne.s32.totalorder %s39, %s40
      %p51 = scmp.eq.s32.totalorder %s31, 0
      %p52 = por %p50, %p51
      %p53 = scmp.ne.s32.totalorder %s39, %s40
      %p54 = scmp.eq.s32.totalorder %s32, 1
      %p55 = por %p53, %p54
      %p57 = scmp.ne.s32.totalorder %s40, %s56
      %p58 = scmp.eq.s32.totalorder %s32, 0
      %p59 = por %p57, %p58
      %s61 = sadd.s32 %s60, 1
      %p64 = scmp.eq.s32.totalorder %s26, 1
      %p65 = scmp.ne.s32.totalorder %s60, %s62
      %p66 = scmp.eq.s32.totalorder %s26, 0
      %p67 = por %p65, %p66
      %p68 = scmp.ne.s32.totalorder %s60, %s62
      %p69 = scmp.eq.s32.totalorder %s31, 1
      %p70 = por %p68, %p69
      %p71 = scmp.ne.s32.totalorder %s62, %s63
      %p72 = scmp.eq.s32.totalorder %s31, 0
      %p73 = por %p71, %p72
      %p74 = scmp.ne.s32.totalorder %s62, %s63
      %p75 = scmp.eq.s32.totalorder %s32, 1
      %p76 = por %p74, %p75
      %p78 = scmp.ne.s32.totalorder %s63, %s77
      %p79 = scmp.eq.s32.totalorder %s32, 0
      %p80 = por %p78, %p79
      %s82 = sadd.s32 %s81, 1
      %p85 = scmp.eq.s32.totalorder %s26, 1
      %p86 = scmp.ne.s32.totalorder %s81, %s83
      %p87 = scmp.eq.s32.totalorder %s26, 0
      %p88 = por %p86, %p87
      %p89 = scmp.ne.s32.totalorder %s81, %s83
      %p90 = scmp.eq.s32.totalorder %s31, 1
      %p91 = por %p89, %p90
      %p92 = scmp.ne.s32.totalorder %s83, %s84
      %p93 = scmp.eq.s32.totalorder %s31, 0
      %p94 = por %p92, %p93
      %p95 = scmp.ne.s32.totalorder %s83, %s84
      %p96 = scmp.eq.s32.totalorder %s32, 1
      %p97 = por %p95, %p96
      %p99 = scmp.ne.s32.totalorder %s84, %s98
      %p100 = scmp.eq.s32.totalorder %s32, 0
      %p101 = por %p99, %p100
      %s103 = sadd.s32 %s102, 1
      %p106 = scmp.eq.s32.totalorder %s26, 1
      %p107 = scmp.ne.s32.totalorder %s102, %s104
      %p108 = scmp.eq.s32.totalorder %s26, 0
      %p109 = por %p107, %p108
      %p110 = scmp.ne.s32.totalorder %s102, %s104
      %p111 = scmp.eq.s32.totalorder %s31, 1
      %p112 = por %p110, %p111
      %p113 = scmp.ne.s32.totalorder %s104, %s105
      %p114 = scmp.eq.s32.totalorder %s31, 0
      %p115 = por %p113, %p114
      %p116 = scmp.ne.s32.totalorder %s104, %s105
      %p117 = scmp.eq.s32.totalorder %s32, 1
      %p118 = por %p116, %p117
      %p120 = scmp.ne.s32.totalorder %s105, %s119
      %p121 = scmp.eq.s32.totalorder %s32, 0
      %p122 = por %p120, %p121
      %s124 = sadd.s32 %s123, 1
      %p127 = scmp.eq.s32.totalorder %s26, 1
      %p128 = scmp.ne.s32.totalorder %s123, %s125
      %p129 = scmp.eq.s32.totalorder %s26, 0
      %p130 = por %p128, %p129
      %p131 = scmp.ne.s32.totalorder %s123, %s125
      %p132 = scmp.eq.s32.totalorder %s31, 1
      %p133 = por %p131, %p132
      %p134 = scmp.ne.s32.totalorder %s125, %s126
      %p135 = scmp.eq.s32.totalorder %s31, 0
      %p136 = por %p134, %p135
      %p137 = scmp.ne.s32.totalorder %s125, %s126
      %p138 = scmp.eq.s32.totalorder %s32, 1
      %p139 = por %p137, %p138
      %p141 = scmp.ne.s32.totalorder %s126, %s140
      %p142 = scmp.eq.s32.totalorder %s32, 0
      %p143 = por %p141, %p142
      %s145 = sadd.s32 %s144, 1
      %p148 = scmp.eq.s32.totalorder %s26, 1
      %p149 = scmp.ne.s32.totalorder %s144, %s146
      %p150 = scmp.eq.s32.totalorder %s26, 0
      %p151 = por %p149, %p150
      %p152 = scmp.ne.s32.totalorder %s144, %s146
      %p153 = scmp.eq.s32.totalorder %s31, 1
      %p154 = por %p152, %p153
      %p155 = scmp.ne.s32.totalorder %s146, %s147
      %p156 = scmp.eq.s32.totalorder %s31, 0
      %p157 = por %p155, %p156
      %p158 = scmp.ne.s32.totalorder %s146, %s147
      %p159 = scmp.eq.s32.totalorder %s32, 1
      %p160 = por %p158, %p159
      %p162 = scmp.ne.s32.totalorder %s147, %s161
      %p163 = scmp.eq.s32.totalorder %s32, 0
      %p164 = por %p162, %p163
      %s166 = sadd.s32 %s165, 1
      %p169 = scmp.eq.s32.totalorder %s26, 1
      %p170 = scmp.ne.s32.totalorder %s165, %s167
      %p171 = scmp.eq.s32.totalorder %s26, 0
      %p172 = por %p170, %p171
      %p173 = scmp.ne.s32.totalorder %s165, %s167
      %p174 = scmp.eq.s32.totalorder %s31, 1
      %p175 = por %p173, %p174
      %p176 = scmp.ne.s32.totalorder %s167, %s168
      %p177 = scmp.eq.s32.totalorder %s31, 0
      %p178 = por %p176, %p177
      %p179 = scmp.ne.s32.totalorder %s167, %s168
      %p180 = scmp.eq.s32.totalorder %s32, 1
      %p181 = por %p179, %p180
      %p183 = scmp.ne.s32.totalorder %s168, %s182
      %p184 = scmp.eq.s32.totalorder %s32, 0
      %p185 = por %p183, %p184
      %s187 = sadd.s32 %s186, 1
      %p190 = scmp.eq.s32.totalorder %s26, 1
      %p191 = scmp.ne.s32.totalorder %s186, %s188
      %p192 = scmp.eq.s32.totalorder %s26, 0
      %p193 = por %p191, %p192
      %p194 = scmp.ne.s32.totalorder %s186, %s188
      %p195 = scmp.eq.s32.totalorder %s31, 1
      %p196 = por %p194, %p195
      %p197 = scmp.ne.s32.totalorder %s188, %s189
      %p198 = scmp.eq.s32.totalorder %s31, 0
      %p199 = por %p197, %p198
      %p200 = scmp.ne.s32.totalorder %s188, %s189
      %p201 = scmp.eq.s32.totalorder %s32, 1
      %p202 = por %p200, %p201
      %p204 = scmp.ne.s32.totalorder %s189, %s203
      %p205 = scmp.eq.s32.totalorder %s32, 0
      %p206 = por %p204, %p205
      %s208 = sadd.s32 %s207, 1
      %p211 = scmp.eq.s32.totalorder %s26, 1
      %p212 = scmp.ne.s32.totalorder %s207, %s209
      %p213 = scmp.eq.s32.totalorder %s26, 0
      %p214 = por %p212, %p213
      %p215 = scmp.ne.s32.totalorder %s207, %s209
      %p216 = scmp.eq.s32.totalorder %s31, 1
      %p217 = por %p215, %p216
      %p218 = scmp.ne.s32.totalorder %s209, %s210
      %p219 = scmp.eq.s32.totalorder %s31, 0
      %p220 = por %p218, %p219
      %p221 = scmp.ne.s32.totalorder %s209, %s210
      %p222 = scmp.eq.s32.totalorder %s32, 1
      %p223 = por %p221, %p222
      %p225 = scmp.ne.s32.totalorder %s210, %s224
      %p226 = scmp.eq.s32.totalorder %s32, 0
      %p227 = por %p225, %p226
      %s229 = sadd.s32 %s228, 1
      %p232 = scmp.eq.s32.totalorder %s26, 1
      %p233 = scmp.ne.s32.totalorder %s228, %s230
      %p234 = scmp.eq.s32.totalorder %s26, 0
      %p235 = por %p233, %p234
      %p236 = scmp.ne.s32.totalorder %s228, %s230
      %p237 = scmp.eq.s32.totalorder %s31, 1
      %p238 = por %p236, %p237
      %p239 = scmp.ne.s32.totalorder %s230, %s231
      %p240 = scmp.eq.s32.totalorder %s31, 0
      %p241 = por %p239, %p240
      %p242 = scmp.ne.s32.totalorder %s230, %s231
      %p243 = scmp.eq.s32.totalorder %s32, 1
      %p244 = por %p242, %p243
      %p246 = scmp.ne.s32.totalorder %s231, %s245
      %p247 = scmp.eq.s32.totalorder %s32, 0
      %p248 = por %p246, %p247
      %s250 = sadd.s32 %s249, 1
      %p253 = scmp.eq.s32.totalorder %s26, 1
      %p254 = scmp.ne.s32.totalorder %s249, %s251
      %p255 = scmp.eq.s32.totalorder %s26, 0
      %p256 = por %p254, %p255
      %p257 = scmp.ne.s32.totalorder %s249, %s251
      %p258 = scmp.eq.s32.totalorder %s31, 1
      %p259 = por %p257, %p258
      %p260 = scmp.ne.s32.totalorder %s251, %s252
      %p261 = scmp.eq.s32.totalorder %s31, 0
      %p262 = por %p260, %p261
      %p263 = scmp.ne.s32.totalorder %s251, %s252
      %p264 = scmp.eq.s32.totalorder %s32, 1
      %p265 = por %p263, %p264
      %p267 = scmp.ne.s32.totalorder %s252, %s266
      %p268 = scmp.eq.s32.totalorder %s32, 0
      %p269 = por %p267, %p268
      %s271 = sadd.s32 %s270, 1
      %p274 = scmp.eq.s32.totalorder %s26, 1
      %p275 = scmp.ne.s32.totalorder %s270, %s272
      %p276 = scmp.eq.s32.totalorder %s26, 0
      %p277 = por %p275, %p276
      %p278 = scmp.ne.s32.totalorder %s270, %s272
      %p279 = scmp.eq.s32.totalorder %s31, 1
      %p280 = por %p278, %p279
      %p281 = scmp.ne.s32.totalorder %s272, %s273
      %p282 = scmp.eq.s32.totalorder %s31, 0
      %p283 = por %p281, %p282
      %p284 = scmp.ne.s32.totalorder %s272, %s273
      %p285 = scmp.eq.s32.totalorder %s32, 1
      %p286 = por %p284, %p285
      %p288 = scmp.ne.s32.totalorder %s273, %s287
      %p289 = scmp.eq.s32.totalorder %s32, 0
      %p290 = por %p288, %p289
      %s292 = sadd.s32 %s291, 1
      %p295 = scmp.eq.s32.totalorder %s26, 1
      %p296 = scmp.ne.s32.totalorder %s291, %s293
      %p297 = scmp.eq.s32.totalorder %s26, 0
      %p298 = por %p296, %p297
      %p299 = scmp.ne.s32.totalorder %s291, %s293
      %p300 = scmp.eq.s32.totalorder %s31, 1
      %p301 = por %p299, %p300
      %p302 = scmp.ne.s32.totalorder %s293, %s294
      %p303 = scmp.eq.s32.totalorder %s31, 0
      %p304 = por %p302, %p303
      %p305 = scmp.ne.s32.totalorder %s293, %s294
      %p306 = scmp.eq.s32.totalorder %s32, 1
      %p307 = por %p305, %p306
      %p309 = scmp.ne.s32.totalorder %s294, %s308
      %p310 = scmp.eq.s32.totalorder %s32, 0
      %p311 = por %p309, %p310
      %s312 = ssub.s32 %s26, %s33
      %p313 = scmp.eq.s32.totalorder %s312, 0
      %s315 = sadd.s32 %s314, 1
      %s316 = scalar_select %p313, %s314, %s315
      %p319 = pneg %p313
      %p320 = scmp.eq.s32.totalorder %s26, 1
      %p321 = por %p319, %p320
      %p322 = scmp.ne.s32.totalorder %s314, %s317
      %p323 = scmp.eq.s32.totalorder %s26, 0
      %p324 = por %p322, %p323
      %p325 = scmp.ne.s32.totalorder %s314, %s317
      %p326 = scmp.eq.s32.totalorder %s31, 1
      %p327 = por %p325, %p326
      %p328 = scmp.ne.s32.totalorder %s317, %s318
      %p329 = scmp.eq.s32.totalorder %s31, 0
      %p330 = por %p328, %p329
      %p331 = scmp.ne.s32.totalorder %s317, %s318
      %p332 = scmp.eq.s32.totalorder %s32, 1
      %p333 = por %p331, %p332
      %p335 = scmp.ne.s32.totalorder %s318, %s334
      %p336 = scmp.eq.s32.totalorder %s32, 0
      %p337 = por %p335, %p336
      %p338 = scmp.le.s32.totalorder 1, %s26
      %p339 = scmp.lt.s32.totalorder %s26, 3
      %p340 = pnand %p338, %p339
      %p341 = pneg %p340
      // Predicated region
      $region9: #{conv_band_decoder_forward.1} parent=5 // pred_check
        _
      $region10: #{conv_band_decoder_forward.1} parent=5 // pred_check_branch
        %343 = sbr.rel (%p340) target = $region12
      $region11: #{conv_band_decoder_forward.1} parent=5 // pred_region
        %s344 = ssub.s32 %s26, 1
        // Predicated region
        $region13: #{conv_band_decoder_forward.1} parent=11 // pred_check
          %p345 = pneg %p73
        $region14: #{conv_band_decoder_forward.1} parent=11 // pred_check_branch
          %347 = sbr.rel (%p345) target = $region16
        $region15: #{conv_band_decoder_forward.1} parent=11 // pred_region
          _
        $region16: #{conv_band_decoder_forward.1} parent=11 // pred_fallthru
          _
        // Predicated region
        $region17: #{conv_band_decoder_forward.1} parent=11 // pred_check
          %p348 = pneg %p94
        $region18: #{conv_band_decoder_forward.1} parent=11 // pred_check_branch
          %350 = sbr.rel (%p348) target = $region20
        $region19: #{conv_band_decoder_forward.1} parent=11 // pred_region
          _
        $region20: #{conv_band_decoder_forward.1} parent=11 // pred_fallthru
          _
        // Predicated region
        $region21: #{conv_band_decoder_forward.1} parent=11 // pred_check
          %p351 = pneg %p115
        $region22: #{conv_band_decoder_forward.1} parent=11 // pred_check_branch
          %353 = sbr.rel (%p351) target = $region24
        $region23: #{conv_band_decoder_forward.1} parent=11 // pred_region
          _
        $region24: #{conv_band_decoder_forward.1} parent=11 // pred_fallthru
          _
        // Predicated region
        $region25: #{conv_band_decoder_forward.1} parent=11 // pred_check
          %p354 = pneg %p136
        $region26: #{conv_band_decoder_forward.1} parent=11 // pred_check_branch
          %356 = sbr.rel (%p354) target = $region28
        $region27: #{conv_band_decoder_forward.1} parent=11 // pred_region
          _
        $region28: #{conv_band_decoder_forward.1} parent=11 // pred_fallthru
          _
        // Predicated region
        $region29: #{conv_band_decoder_forward.1} parent=11 // pred_check
          %p357 = pneg %p157
        $region30: #{conv_band_decoder_forward.1} parent=11 // pred_check_branch
          %359 = sbr.rel (%p357) target = $region32
        $region31: #{conv_band_decoder_forward.1} parent=11 // pred_region
          _
        $region32: #{conv_band_decoder_forward.1} parent=11 // pred_fallthru
          _
        // Predicated region
        $region33: #{conv_band_decoder_forward.1} parent=11 // pred_check
          %p360 = pneg %p178
        $region34: #{conv_band_decoder_forward.1} parent=11 // pred_check_branch
          %362 = sbr.rel (%p360) target = $region36
        $region35: #{conv_band_decoder_forward.1} parent=11 // pred_region
          _
        $region36: #{conv_band_decoder_forward.1} parent=11 // pred_fallthru
          _
        // Predicated region
        $region37: #{conv_band_decoder_forward.1} parent=11 // pred_check
          %p363 = pneg %p199
        $region38: #{conv_band_decoder_forward.1} parent=11 // pred_check_branch
          %365 = sbr.rel (%p363) target = $region40
        $region39: #{conv_band_decoder_forward.1} parent=11 // pred_region
          %367 = vsyncadd [#allocation4], 0
          %s368 = sshll.u32 %s7, 4
          %s369 = int_to_ptr.hbm [resolvable:$true] %s368
          %s370 = sshll.u32 [#allocation3], 4
          %s371 = int_to_ptr.vmem [resolvable:$true] %s370
          %376 = dma.hbm_to_vmem [thread:$0]  %s369, 3584, %s371, [#allocation4], 128, 128, 8
        $region40: #{conv_band_decoder_forward.1} parent=11 // pred_fallthru
          _
        // Predicated region
        $region41: #{conv_band_decoder_forward.1} parent=11 // pred_check
          %p377 = pneg %p220
        $region42: #{conv_band_decoder_forward.1} parent=11 // pred_check_branch
          %379 = sbr.rel (%p377) target = $region44
        $region43: #{conv_band_decoder_forward.1} parent=11 // pred_region
          _
        $region44: #{conv_band_decoder_forward.1} parent=11 // pred_fallthru
          _
        // Predicated region
        $region45: #{conv_band_decoder_forward.1} parent=11 // pred_check
          %p380 = pneg %p241
        $region46: #{conv_band_decoder_forward.1} parent=11 // pred_check_branch
          %382 = sbr.rel (%p380) target = $region48
        $region47: #{conv_band_decoder_forward.1} parent=11 // pred_region
          %384 = vsyncadd [#allocation7], 0
          %s385 = sshll.u32 %s9, 4
          %s386 = int_to_ptr.hbm [resolvable:$true] %s385
          %s387 = sshll.u32 [#allocation6], 4
          %s388 = int_to_ptr.vmem [resolvable:$true] %s387
          %393 = dma.hbm_to_vmem [thread:$0]  %s386, 3584, %s388, [#allocation7], 128, 128, 8
        $region48: #{conv_band_decoder_forward.1} parent=11 // pred_fallthru
          _
        // Predicated region
        $region49: #{conv_band_decoder_forward.1} parent=11 // pred_check
          %p394 = pneg %p262
        $region50: #{conv_band_decoder_forward.1} parent=11 // pred_check_branch
          %396 = sbr.rel (%p394) target = $region52
        $region51: #{conv_band_decoder_forward.1} parent=11 // pred_region
          _
        $region52: #{conv_band_decoder_forward.1} parent=11 // pred_fallthru
          _
        // Predicated region
        $region53: #{conv_band_decoder_forward.1} parent=11 // pred_check
          %p397 = pneg %p283
        $region54: #{conv_band_decoder_forward.1} parent=11 // pred_check_branch
          %399 = sbr.rel (%p397) target = $region56
        $region55: #{conv_band_decoder_forward.1} parent=11 // pred_region
          _
        $region56: #{conv_band_decoder_forward.1} parent=11 // pred_fallthru
          _
        // Predicated region
        $region57: #{conv_band_decoder_forward.1} parent=11 // pred_check
          %p400 = pneg %p304
        $region58: #{conv_band_decoder_forward.1} parent=11 // pred_check_branch
          %402 = sbr.rel (%p400) target = $region60
        $region59: #{conv_band_decoder_forward.1} parent=11 // pred_region
          _
        $region60: #{conv_band_decoder_forward.1} parent=11 // pred_fallthru
          _
      $region12: #{conv_band_decoder_forward.1} parent=5 // pred_fallthru
        _
      %p403 = scmp.lt.s32.totalorder %s26, 2
      // Predicated region
      $region61: #{conv_band_decoder_forward.1} parent=5 // pred_check
        %p404 = pneg %p403
      $region62: #{conv_band_decoder_forward.1} parent=5 // pred_check_branch
        %406 = sbr.rel (%p404) target = $region64
      $region63: #{conv_band_decoder_forward.1} parent=5 // pred_region
        // Predicated region
        $region65: #{conv_band_decoder_forward.1} parent=63 // pred_check
          %p407 = pneg %p46
        $region66: #{conv_band_decoder_forward.1} parent=63 // pred_check_branch
          %409 = sbr.rel (%p407) target = $region68
        $region67: #{conv_band_decoder_forward.1} parent=63 // pred_region
          %p410 = scmp.lt.s32.totalorder %s26, 1
          %s411 = scalar_select %p410, %s26, 1
          %s412 = smul.addr %s411, 4
          %s413 = smul.addr %s412, 8
          %s414 = scalar_lea.vmem %s0, %s413
        $region68: #{conv_band_decoder_forward.1} parent=63 // pred_fallthru
          _
      $region64: #{conv_band_decoder_forward.1} parent=5 // pred_fallthru
        _
      %p415 = scmp.le.s32.totalorder 1, %s26
      %p416 = scmp.lt.s32.totalorder %s26, 3
      %p417 = pnand %p415, %p416
      %p418 = pneg %p417
      // Predicated region
      $region69: #{conv_band_decoder_forward.1} parent=5 // pred_check
        _
      $region70: #{conv_band_decoder_forward.1} parent=5 // pred_check_branch
        %420 = sbr.rel (%p417) target = $region72
      $region71: #{conv_band_decoder_forward.1} parent=5 // pred_region
        %s421 = ssub.s32 %s26, 1
        // Predicated region
        $region73: #{conv_band_decoder_forward.1} parent=71 // pred_check
          %p422 = pneg %p199
        $region74: #{conv_band_decoder_forward.1} parent=71 // pred_check_branch
          %424 = sbr.rel (%p422) target = $region76
        $region75: #{conv_band_decoder_forward.1} parent=71 // pred_region
          %426 = dma.done [#allocation4], 3584
        $region76: #{conv_band_decoder_forward.1} parent=71 // pred_fallthru
          _
        // Predicated region
        $region77: #{conv_band_decoder_forward.1} parent=71 // pred_check
          %p427 = pneg %p241
        $region78: #{conv_band_decoder_forward.1} parent=71 // pred_check_branch
          %429 = sbr.rel (%p427) target = $region80
        $region79: #{conv_band_decoder_forward.1} parent=71 // pred_region
          %431 = dma.done [#allocation7], 3584
        $region80: #{conv_band_decoder_forward.1} parent=71 // pred_fallthru
          _
        %p432 = scmp.lt.s32.totalorder %s31, 1
        %s433 = scalar_select %p432, %s31, 1
        %s434 = smul.addr %s433, 4
        %s435 = smul.addr %s434, 8
        %s436 = scalar_lea.vmem %s0, %s435
        %p437 = pneg %p52
        %p438 = pneg %p49
        %p439 = pneg %p73
        %p440 = pneg %p70
        %p441 = pneg %p94
        %p442 = pneg %p91
        %p443 = pneg %p115
        %p444 = pneg %p112
        %p445 = pneg %p136
        %p446 = pneg %p133
        %p447 = pneg %p157
        %p448 = pneg %p154
        %p449 = pneg %p178
        %p450 = pneg %p175
        %p451 = pneg %p199
        %p452 = pneg %p196
        %p453 = pneg %p220
        %p454 = pneg %p217
        %p455 = pneg %p241
        %p456 = pneg %p238
        %p457 = pneg %p262
        %p458 = pneg %p259
        %p459 = pneg %p283
        %p460 = pneg %p280
        %p461 = pneg %p304
        %p462 = pneg %p301
        %p463 = pneg %p330
        %p464 = pneg %p327
        %s465 = sand.u32 %s317, 1
        %s466 = scalar_lea.sflag [#allocation5], %s465
        %s467 = sand.u32 %s317, 1
        %s468 = scalar_lea.vmem [#allocation8], %s467
        %p469 = scmp.lt.s32.totalorder %s31, 1
        %s470 = scalar_select %p469, %s31, 1
        %s471 = smul.addr %s470, 4
        %s472 = smul.addr %s471, 8
        %s473 = scalar_lea.vmem %s0, %s472
        %v474 = vld [vmem:[%s473] sm:$0xff]
        %v475 = vld [vmem:[%s473 + $0x8] sm:$0xff]
        %v476 = vld [vmem:[%s473 + $0x10] sm:$0xff]
        %v477 = vld [vmem:[%s473 + $0x18] sm:$0xff]
        %v478 = vld [vmem:[%s1] sm:$0xff]
        %v479 = vld [vmem:[%s1 + $0x8] sm:$0xff]
        %v480 = vld [vmem:[%s1 + $0x10] sm:$0xff]
        %v481 = vld [vmem:[%s1 + $0x18] sm:$0xff]
        %v482 = vld [vmem:[%s2] sm:$0x1]
        %v484 = vperm.slane %v482, 0
        %vm486 = vcmask 261120
        %v488 = vsel %vm486, %v474, 0
        %v491 = vsel %vm486, %v475, 0
        %v494 = vsel %vm486, %v476, 0
        %v497 = vsel %vm486, %v477, 0
        %499 = vmatpush.msra.mxu0 0.0
        %500 = vmatpush.msra.mxu0 0.0
        %501 = vmatpush.msra.mxu0 0.0
        %502 = vmatpush.msra.mxu0 0.0
        %503 = vmatpush.msra.mxu0 0.0
        %504 = vmatpush.msra.mxu0 0.0
        %505 = vmatpush.msra.mxu0 0.0
        %506 = vmatpush.msra.mxu0 0.0
        %507 = vmatpush.msra.mxu0 0.0
        %508 = vmatpush.msra.mxu0 0.0
        %509 = vmatpush.msra.mxu0 0.0
        %510 = vmatpush.msra.mxu0 0.0
        %511 = vmatpush.msra.mxu0 %v481
        %512 = vmatpush.msra.mxu0 %v480
        %513 = vmatpush.msra.mxu0 %v479
        %514 = vmatpush.msra.mxu0 %v478
        %515 = vmatmul.f32.gmra.mxu0 %v488
        %v516 = vpop.f32.mrf.mxu0
        %v517 = vadd.f32 %v484, %v516
        %518 = vmatmul.f32.gmra.mxu0 %v491
        %v519 = vpop.f32.mrf.mxu0
        %v520 = vadd.f32 %v484, %v519
        %521 = vmatmul.f32.gmra.mxu0 %v494
        %v522 = vpop.f32.mrf.mxu0
        %v523 = vadd.f32 %v484, %v522
        %524 = vmatmul.f32.gmra.mxu0 %v497
        %v525 = vpop.f32.mrf.mxu0
        %v526 = vadd.f32 %v484, %v525
        %527 = vdwg.mxu0
        %vm528 = vcmp.gt.f32.partialorder %v517, 0.0
        %vm529 = vcmp.gt.f32.partialorder %v520, 0.0
        %vm530 = vcmp.gt.f32.partialorder %v523, 0.0
        %vm531 = vcmp.gt.f32.partialorder %v526, 0.0
        %v532 = vmul.f32 %v517, 0.2
        %v533 = vmul.f32 %v520, 0.2
        %v534 = vmul.f32 %v523, 0.2
        %v535 = vmul.f32 %v526, 0.2
        %v536 = vsel %vm528, %v517, %v532
        %v537 = vsel %vm529, %v520, %v533
        %v538 = vsel %vm530, %v523, %v534
        %v539 = vsel %vm531, %v526, %v535
        %v540 = vld [vmem:[%s3] sm:$0xff]
        %v541 = vld [vmem:[%s3 + $0x8] sm:$0xff]
        %v542 = vld [vmem:[%s3 + $0x10] sm:$0xff]
        %v543 = vld [vmem:[%s3 + $0x18] sm:$0xff]
        %v544 = vld [vmem:[%s4] sm:$0x1]
        %v546 = vperm.slane %v544, 0
        %v549 = vsel %vm486, %v536, 0
        %v552 = vsel %vm486, %v537, 0
        %v555 = vsel %vm486, %v538, 0
        %v558 = vsel %vm486, %v539, 0
        %560 = vmatpush.msra.mxu0 0.0
        %561 = vmatpush.msra.mxu0 0.0
        %562 = vmatpush.msra.mxu0 0.0
        %563 = vmatpush.msra.mxu0 0.0
        %564 = vmatpush.msra.mxu0 0.0
        %565 = vmatpush.msra.mxu0 0.0
        %566 = vmatpush.msra.mxu0 0.0
        %567 = vmatpush.msra.mxu0 0.0
        %568 = vmatpush.msra.mxu0 0.0
        %569 = vmatpush.msra.mxu0 0.0
        %570 = vmatpush.msra.mxu0 0.0
        %571 = vmatpush.msra.mxu0 0.0
        %572 = vmatpush.msra.mxu0 %v543
        %573 = vmatpush.msra.mxu0 %v542
        %574 = vmatpush.msra.mxu0 %v541
        %575 = vmatpush.msra.mxu0 %v540
        %576 = vmatmul.f32.gmra.mxu0 %v549
        %v577 = vpop.f32.mrf.mxu0
        %v578 = vadd.f32 %v546, %v577
        %579 = vmatmul.f32.gmra.mxu0 %v552
        %v580 = vpop.f32.mrf.mxu0
        %v581 = vadd.f32 %v546, %v580
        %582 = vmatmul.f32.gmra.mxu0 %v555
        %v583 = vpop.f32.mrf.mxu0
        %v584 = vadd.f32 %v546, %v583
        %585 = vmatmul.f32.gmra.mxu0 %v558
        %v586 = vpop.f32.mrf.mxu0
        %v587 = vadd.f32 %v546, %v586
        %588 = vdwg.mxu0
        %vm589 = vcmp.gt.f32.partialorder %v578, 0.0
        %vm590 = vcmp.gt.f32.partialorder %v581, 0.0
        %vm591 = vcmp.gt.f32.partialorder %v584, 0.0
        %vm592 = vcmp.gt.f32.partialorder %v587, 0.0
        %v593 = vmul.f32 %v578, 0.2
        %v594 = vmul.f32 %v581, 0.2
        %v595 = vmul.f32 %v584, 0.2
        %v596 = vmul.f32 %v587, 0.2
        %v597 = vsel %vm589, %v578, %v593
        %v598 = vsel %vm590, %v581, %v594
        %v599 = vsel %vm591, %v584, %v595
        %v600 = vsel %vm592, %v587, %v596
        %v601 = vld [vmem:[%s5] sm:$0xff]
        %v602 = vld [vmem:[%s5 + $0x8] sm:$0xff]
        %v603 = vld [vmem:[%s5 + $0x10] sm:$0xff]
        %v604 = vld [vmem:[%s5 + $0x18] sm:$0xff]
        %v605 = vld [vmem:[%s6] sm:$0x1]
        %v607 = vperm.slane %v605, 0
        %v610 = vsel %vm486, %v597, 0
        %v613 = vsel %vm486, %v598, 0
        %v616 = vsel %vm486, %v599, 0
        %v619 = vsel %vm486, %v600, 0
        %621 = vmatpush.msra.mxu0 0.0
        %622 = vmatpush.msra.mxu0 0.0
        %623 = vmatpush.msra.mxu0 0.0
        %624 = vmatpush.msra.mxu0 0.0
        %625 = vmatpush.msra.mxu0 0.0
        %626 = vmatpush.msra.mxu0 0.0
        %627 = vmatpush.msra.mxu0 0.0
        %628 = vmatpush.msra.mxu0 0.0
        %629 = vmatpush.msra.mxu0 0.0
        %630 = vmatpush.msra.mxu0 0.0
        %631 = vmatpush.msra.mxu0 0.0
        %632 = vmatpush.msra.mxu0 0.0
        %633 = vmatpush.msra.mxu0 %v604
        %634 = vmatpush.msra.mxu0 %v603
        %635 = vmatpush.msra.mxu0 %v602
        %636 = vmatpush.msra.mxu0 %v601
        %637 = vmatmul.f32.gmra.mxu0 %v610
        %v638 = vpop.f32.mrf.mxu0
        %v639 = vadd.f32 %v607, %v638
        %640 = vmatmul.f32.gmra.mxu0 %v613
        %v641 = vpop.f32.mrf.mxu0
        %v642 = vadd.f32 %v607, %v641
        %643 = vmatmul.f32.gmra.mxu0 %v616
        %v644 = vpop.f32.mrf.mxu0
        %v645 = vadd.f32 %v607, %v644
        %646 = vmatmul.f32.gmra.mxu0 %v619
        %v647 = vpop.f32.mrf.mxu0
        %v648 = vadd.f32 %v607, %v647
        %649 = vdwg.mxu0
        %vm650 = vcmp.gt.f32.partialorder %v639, 0.0
        %vm651 = vcmp.gt.f32.partialorder %v642, 0.0
        %vm652 = vcmp.gt.f32.partialorder %v645, 0.0
        %vm653 = vcmp.gt.f32.partialorder %v648, 0.0
        %v654 = vmul.f32 %v639, 0.2
        %v655 = vmul.f32 %v642, 0.2
        %v656 = vmul.f32 %v645, 0.2
        %v657 = vmul.f32 %v648, 0.2
        %v658 = vsel %vm650, %v639, %v654
        %v659 = vsel %vm651, %v642, %v655
        %v660 = vsel %vm652, %v645, %v656
        %v661 = vsel %vm653, %v648, %v657
        %v662 = vld [vmem:[#allocation3] sm:$0xff]
        %v663 = vld [vmem:[#allocation3 + $0x8] sm:$0xff]
        %v664 = vld [vmem:[#allocation3 + $0x10] sm:$0xff]
        %v665 = vld [vmem:[#allocation3 + $0x18] sm:$0xff]
        %v666 = vld [vmem:[#allocation3 + $0x20] sm:$0xff]
        %v667 = vld [vmem:[#allocation3 + $0x28] sm:$0xff]
        %v668 = vld [vmem:[#allocation3 + $0x30] sm:$0xff]
        %v669 = vld [vmem:[#allocation3 + $0x38] sm:$0xff]
        %v670 = vld [vmem:[#allocation3 + $0x40] sm:$0xff]
        %v671 = vld [vmem:[#allocation3 + $0x48] sm:$0xff]
        %v672 = vld [vmem:[#allocation3 + $0x50] sm:$0xff]
        %v673 = vld [vmem:[#allocation3 + $0x58] sm:$0xff]
        %v674 = vld [vmem:[#allocation3 + $0x60] sm:$0xff]
        %v675 = vld [vmem:[#allocation3 + $0x68] sm:$0xff]
        %v676 = vld [vmem:[#allocation3 + $0x70] sm:$0xff]
        %v677 = vld [vmem:[#allocation3 + $0x78] sm:$0xff]
        %v678 = vld [vmem:[#allocation3 + $0x80] sm:$0xff]
        %v679 = vld [vmem:[#allocation3 + $0x88] sm:$0xff]
        %v680 = vld [vmem:[#allocation3 + $0x90] sm:$0xff]
        %v681 = vld [vmem:[#allocation3 + $0x98] sm:$0xff]
        %v682 = vld [vmem:[#allocation3 + $0xa0] sm:$0xff]
        %v683 = vld [vmem:[#allocation3 + $0xa8] sm:$0xff]
        %v684 = vld [vmem:[#allocation3 + $0xb0] sm:$0xff]
        %v685 = vld [vmem:[#allocation3 + $0xb8] sm:$0xff]
        %v686 = vld [vmem:[#allocation3 + $0xc0] sm:$0xff]
        %v687 = vld [vmem:[#allocation3 + $0xc8] sm:$0xff]
        %v688 = vld [vmem:[#allocation3 + $0xd0] sm:$0xff]
        %v689 = vld [vmem:[#allocation3 + $0xd8] sm:$0xff]
        %v690 = vld [vmem:[%s8] sm:$0x1]
        %v691 = vlaneseq
        %v692 = vshrl.u32 %v691, 7
        %v693 = vadd.s32 %v692, 8
        %v694 = vadd.s32 %v692, 16
        %v695 = vadd.s32 %v692, 24
        %v696 = vadd.s32 %v692, 32
        %v697 = vadd.s32 %v692, 40
        %v698 = vadd.s32 %v692, 48
        %v699 = vadd.s32 %v692, 56
        %v700 = vlaneseq
        %v701 = vand.u32 %v700, 127
        %v702 = vmul.u32 %v701, 2
        %v703 = vsub.s32 %v692, %v702
        %v704 = vsub.s32 %v693, %v702
        %v705 = vsub.s32 %v694, %v702
        %v706 = vsub.s32 %v695, %v702
        %v707 = vsub.s32 %v696, %v702
        %v708 = vsub.s32 %v697, %v702
        %v709 = vsub.s32 %v698, %v702
        %v710 = vsub.s32 %v699, %v702
        %vm711 = vcmp.ge.s32.totalorder %v703, 0
        %vm712 = vcmp.ge.s32.totalorder %v704, 0
        %vm713 = vcmp.ge.s32.totalorder %v705, 0
        %vm714 = vcmp.ge.s32.totalorder %v706, 0
        %vm715 = vcmp.ge.s32.totalorder %v707, 0
        %vm716 = vcmp.ge.s32.totalorder %v708, 0
        %vm717 = vcmp.ge.s32.totalorder %v709, 0
        %vm718 = vcmp.ge.s32.totalorder %v710, 0
        %vm719 = vcmp.le.s32.totalorder %v703, 1
        %vm720 = vcmp.le.s32.totalorder %v704, 1
        %vm721 = vcmp.le.s32.totalorder %v705, 1
        %vm722 = vcmp.le.s32.totalorder %v706, 1
        %vm723 = vcmp.le.s32.totalorder %v707, 1
        %vm724 = vcmp.le.s32.totalorder %v708, 1
        %vm725 = vcmp.le.s32.totalorder %v709, 1
        %vm726 = vcmp.le.s32.totalorder %v710, 1
        %vm727 = vmand %vm711, %vm719
        %vm728 = vmand %vm712, %vm720
        %vm729 = vmand %vm713, %vm721
        %vm730 = vmand %vm714, %vm722
        %vm731 = vmand %vm715, %vm723
        %vm732 = vmand %vm716, %vm724
        %vm733 = vmand %vm717, %vm725
        %vm734 = vmand %vm718, %vm726
        %v735 = vsel %vm727, 1.0, 0.0
        %v736 = vsel %vm728, 1.0, 0.0
        %v737 = vsel %vm729, 1.0, 0.0
        %v738 = vsel %vm730, 1.0, 0.0
        %v739 = vsel %vm731, 1.0, 0.0
        %v740 = vsel %vm732, 1.0, 0.0
        %v741 = vsel %vm733, 1.0, 0.0
        %v742 = vsel %vm734, 1.0, 0.0
        %v744 = vsel %vm486, %v735, 0
        %v747 = vsel %vm486, %v736, 0
        %v750 = vsel %vm486, %v737, 0
        %v753 = vsel %vm486, %v738, 0
        %v756 = vsel %vm486, %v739, 0
        %v759 = vsel %vm486, %v740, 0
        %v762 = vsel %vm486, %v741, 0
        %v765 = vsel %vm486, %v742, 0
        %767 = vmatpush.msra.mxu0 0.0
        %768 = vmatpush.msra.mxu0 0.0
        %769 = vmatpush.msra.mxu0 0.0
        %770 = vmatpush.msra.mxu0 0.0
        %771 = vmatpush.msra.mxu0 0.0
        %772 = vmatpush.msra.mxu0 0.0
        %773 = vmatpush.msra.mxu0 0.0
        %774 = vmatpush.msra.mxu0 0.0
        %775 = vmatpush.msra.mxu0 0.0
        %776 = vmatpush.msra.mxu0 0.0
        %777 = vmatpush.msra.mxu0 0.0
        %778 = vmatpush.msra.mxu0 0.0
        %779 = vmatpush.msra.mxu0 %v661
        %780 = vmatpush.msra.mxu0 %v660
        %781 = vmatpush.msra.mxu0 %v659
        %782 = vmatpush.msra.mxu0 %v658
        %783 = vmatmul.f32.gmra.mxu0 %v744
        %v784 = vpop.f32.mrf.mxu0
        %v785 = vadd.f32 0.0, %v784
        %786 = vmatmul.f32.gmra.mxu0 %v747
        %v787 = vpop.f32.mrf.mxu0
        %v788 = vadd.f32 0.0, %v787
        %789 = vmatmul.f32.gmra.mxu0 %v750
        %v790 = vpop.f32.mrf.mxu0
        %v791 = vadd.f32 0.0, %v790
        %792 = vmatmul.f32.gmra.mxu0 %v753
        %v793 = vpop.f32.mrf.mxu0
        %v794 = vadd.f32 0.0, %v793
        %795 = vmatmul.f32.gmra.mxu0 %v756
        %v796 = vpop.f32.mrf.mxu0
        %v797 = vadd.f32 0.0, %v796
        %798 = vmatmul.f32.gmra.mxu0 %v759
        %v799 = vpop.f32.mrf.mxu0
        %v800 = vadd.f32 0.0, %v799
        %801 = vmatmul.f32.gmra.mxu0 %v762
        %v802 = vpop.f32.mrf.mxu0
        %v803 = vadd.f32 0.0, %v802
        %804 = vmatmul.f32.gmra.mxu0 %v765
        %v805 = vpop.f32.mrf.mxu0
        %v806 = vadd.f32 0.0, %v805
        %807 = vdwg.mxu0
        %vm816 = vcmask 1042432
        %v817 = vrot.slane %v785, 5
        %v818 = vrot.slane %v788, 5
        %v819 = vsel %vm816, %v817, %v818
        %v820 = vrot.slane %v791, 5
        %v821 = vsel %vm816, %v818, %v820
        %v822 = vrot.slane %v794, 5
        %v823 = vsel %vm816, %v820, %v822
        %v824 = vrot.slane %v797, 5
        %v825 = vsel %vm816, %v822, %v824
        %v826 = vrot.slane %v800, 5
        %v827 = vsel %vm816, %v824, %v826
        %v828 = vrot.slane %v803, 5
        %v829 = vsel %vm816, %v826, %v828
        %v830 = vrot.slane %v806, 5
        %v831 = vsel %vm816, %v828, %v830
        %v841 = vsel %vm816, 0.0, %v817
        %v842 = vsel %vm816, %v830, 0.0
        %vm845 = vcmask 1046528
        %v846 = vrot.slane %v841, 1
        %v847 = vrot.slane %v819, 1
        %v848 = vsel %vm845, %v846, %v847
        %v849 = vrot.slane %v821, 1
        %v850 = vsel %vm845, %v847, %v849
        %v851 = vrot.slane %v823, 1
        %v852 = vsel %vm845, %v849, %v851
        %v853 = vrot.slane %v825, 1
        %v854 = vsel %vm845, %v851, %v853
        %v855 = vrot.slane %v827, 1
        %v856 = vsel %vm845, %v853, %v855
        %v857 = vrot.slane %v829, 1
        %v858 = vsel %vm845, %v855, %v857
        %v859 = vrot.slane %v831, 1
        %v860 = vsel %vm845, %v857, %v859
        %v861 = vrot.slane %v842, 1
        %v862 = vsel %vm845, %v859, %v861
        %863 = vrot.lane.b32.xlu0 %v848, 32
        %v864 = vpop.permute.xlu0 %863
        %865 = vrot.lane.b32.xlu0 %v850, 32
        %v866 = vpop.permute.xlu0 %865
        %867 = vrot.lane.b32.xlu0 %v852, 32
        %v868 = vpop.permute.xlu0 %867
        %869 = vrot.lane.b32.xlu0 %v854, 32
        %v870 = vpop.permute.xlu0 %869
        %871 = vrot.lane.b32.xlu0 %v856, 32
        %v872 = vpop.permute.xlu0 %871
        %873 = vrot.lane.b32.xlu0 %v858, 32
        %v874 = vpop.permute.xlu0 %873
        %875 = vrot.lane.b32.xlu0 %v860, 32
        %v876 = vpop.permute.xlu0 %875
        %877 = vrot.lane.b32.xlu0 %v862, 32
        %v878 = vpop.permute.xlu0 %877
        %vm887 = vcmask 1045504
        %v888 = vrot.slane %v841, 2
        %v889 = vrot.slane %v819, 2
        %v890 = vsel %vm887, %v888, %v889
        %v891 = vrot.slane %v821, 2
        %v892 = vsel %vm887, %v889, %v891
        %v893 = vrot.slane %v823, 2
        %v894 = vsel %vm887, %v891, %v893
        %v895 = vrot.slane %v825, 2
        %v896 = vsel %vm887, %v893, %v895
        %v897 = vrot.slane %v827, 2
        %v898 = vsel %vm887, %v895, %v897
        %v899 = vrot.slane %v829, 2
        %v900 = vsel %vm887, %v897, %v899
        %v901 = vrot.slane %v831, 2
        %v902 = vsel %vm887, %v899, %v901
        %v903 = vrot.slane %v842, 2
        %v904 = vsel %vm887, %v901, %v903
        %905 = vrot.lane.b32.xlu0 %v890, 64
        %v906 = vpop.permute.xlu0 %905
        %907 = vrot.lane.b32.xlu0 %v892, 64
        %v908 = vpop.permute.xlu0 %907
        %909 = vrot.lane.b32.xlu0 %v894, 64
        %v910 = vpop.permute.xlu0 %909
        %911 = vrot.lane.b32.xlu0 %v896, 64
        %v912 = vpop.permute.xlu0 %911
        %913 = vrot.lane.b32.xlu0 %v898, 64
        %v914 = vpop.permute.xlu0 %913
        %915 = vrot.lane.b32.xlu0 %v900, 64
        %v916 = vpop.permute.xlu0 %915
        %917 = vrot.lane.b32.xlu0 %v902, 64
        %v918 = vpop.permute.xlu0 %917
        %919 = vrot.lane.b32.xlu0 %v904, 64
        %v920 = vpop.permute.xlu0 %919
        %vm929 = vcmask 1044480
        %v930 = vrot.slane %v841, 3
        %v931 = vrot.slane %v819, 3
        %v932 = vsel %vm929, %v930, %v931
        %v933 = vrot.slane %v821, 3
        %v934 = vsel %vm929, %v931, %v933
        %v935 = vrot.slane %v823, 3
        %v936 = vsel %vm929, %v933, %v935
        %v937 = vrot.slane %v825, 3
        %v938 = vsel %vm929, %v935, %v937
        %v939 = vrot.slane %v827, 3
        %v940 = vsel %vm929, %v937, %v939
        %v941 = vrot.slane %v829, 3
        %v942 = vsel %vm929, %v939, %v941
        %v943 = vrot.slane %v831, 3
        %v944 = vsel %vm929, %v941, %v943
        %v945 = vrot.slane %v842, 3
        %v946 = vsel %vm929, %v943, %v945
        %947 = vrot.lane.b32.xlu0 %v932, 96
        %v948 = vpop.permute.xlu0 %947
        %949 = vrot.lane.b32.xlu0 %v934, 96
        %v950 = vpop.permute.xlu0 %949
        %951 = vrot.lane.b32.xlu0 %v936, 96
        %v952 = vpop.permute.xlu0 %951
        %953 = vrot.lane.b32.xlu0 %v938, 96
        %v954 = vpop.permute.xlu0 %953
        %955 = vrot.lane.b32.xlu0 %v940, 96
        %v956 = vpop.permute.xlu0 %955
        %957 = vrot.lane.b32.xlu0 %v942, 96
        %v958 = vpop.permute.xlu0 %957
        %959 = vrot.lane.b32.xlu0 %v944, 96
        %v960 = vpop.permute.xlu0 %959
        %961 = vrot.lane.b32.xlu0 %v946, 96
        %v962 = vpop.permute.xlu0 %961
        %vm971 = vcmask 1043456
        %v972 = vrot.slane %v841, 4
        %v973 = vrot.slane %v819, 4
        %v974 = vsel %vm971, %v972, %v973
        %v975 = vrot.slane %v821, 4
        %v976 = vsel %vm971, %v973, %v975
        %v977 = vrot.slane %v823, 4
        %v978 = vsel %vm971, %v975, %v977
        %v979 = vrot.slane %v825, 4
        %v980 = vsel %vm971, %v977, %v979
        %v981 = vrot.slane %v827, 4
        %v982 = vsel %vm971, %v979, %v981
        %v983 = vrot.slane %v829, 4
        %v984 = vsel %vm971, %v981, %v983
        %v985 = vrot.slane %v831, 4
        %v986 = vsel %vm971, %v983, %v985
        %v987 = vrot.slane %v842, 4
        %v988 = vsel %vm971, %v985, %v987
        %v997 = vrot.slane %v841, 5
        %v998 = vrot.slane %v819, 5
        %v999 = vsel %vm816, %v997, %v998
        %v1000 = vrot.slane %v821, 5
        %v1001 = vsel %vm816, %v998, %v1000
        %v1002 = vrot.slane %v823, 5
        %v1003 = vsel %vm816, %v1000, %v1002
        %v1004 = vrot.slane %v825, 5
        %v1005 = vsel %vm816, %v1002, %v1004
        %v1006 = vrot.slane %v827, 5
        %v1007 = vsel %vm816, %v1004, %v1006
        %v1008 = vrot.slane %v829, 5
        %v1009 = vsel %vm816, %v1006, %v1008
        %v1010 = vrot.slane %v831, 5
        %v1011 = vsel %vm816, %v1008, %v1010
        %v1012 = vrot.slane %v842, 5
        %v1013 = vsel %vm816, %v1010, %v1012
        %1014 = vrot.lane.b32.xlu0 %v999, 32
        %v1015 = vpop.permute.xlu0 %1014
        %1016 = vrot.lane.b32.xlu0 %v1001, 32
        %v1017 = vpop.permute.xlu0 %1016
        %1018 = vrot.lane.b32.xlu0 %v1003, 32
        %v1019 = vpop.permute.xlu0 %1018
        %1020 = vrot.lane.b32.xlu0 %v1005, 32
        %v1021 = vpop.permute.xlu0 %1020
        %1022 = vrot.lane.b32.xlu0 %v1007, 32
        %v1023 = vpop.permute.xlu0 %1022
        %1024 = vrot.lane.b32.xlu0 %v1009, 32
        %v1025 = vpop.permute.xlu0 %1024
        %1026 = vrot.lane.b32.xlu0 %v1011, 32
        %v1027 = vpop.permute.xlu0 %1026
        %1028 = vrot.lane.b32.xlu0 %v1013, 32
        %v1029 = vpop.permute.xlu0 %1028
        %vm1038 = vcmask 1041408
        %v1039 = vrot.slane %v841, 6
        %v1040 = vrot.slane %v819, 6
        %v1041 = vsel %vm1038, %v1039, %v1040
        %v1042 = vrot.slane %v821, 6
        %v1043 = vsel %vm1038, %v1040, %v1042
        %v1044 = vrot.slane %v823, 6
        %v1045 = vsel %vm1038, %v1042, %v1044
        %v1046 = vrot.slane %v825, 6
        %v1047 = vsel %vm1038, %v1044, %v1046
        %v1048 = vrot.slane %v827, 6
        %v1049 = vsel %vm1038, %v1046, %v1048
        %v1050 = vrot.slane %v829, 6
        %v1051 = vsel %vm1038, %v1048, %v1050
        %v1052 = vrot.slane %v831, 6
        %v1053 = vsel %vm1038, %v1050, %v1052
        %v1054 = vrot.slane %v842, 6
        %v1055 = vsel %vm1038, %v1052, %v1054
        %1056 = vrot.lane.b32.xlu0 %v1041, 64
        %v1057 = vpop.permute.xlu0 %1056
        %1058 = vrot.lane.b32.xlu0 %v1043, 64
        %v1059 = vpop.permute.xlu0 %1058
        %1060 = vrot.lane.b32.xlu0 %v1045, 64
        %v1061 = vpop.permute.xlu0 %1060
        %1062 = vrot.lane.b32.xlu0 %v1047, 64
        %v1063 = vpop.permute.xlu0 %1062
        %1064 = vrot.lane.b32.xlu0 %v1049, 64
        %v1065 = vpop.permute.xlu0 %1064
        %1066 = vrot.lane.b32.xlu0 %v1051, 64
        %v1067 = vpop.permute.xlu0 %1066
        %1068 = vrot.lane.b32.xlu0 %v1053, 64
        %v1069 = vpop.permute.xlu0 %1068
        %1070 = vrot.lane.b32.xlu0 %v1055, 64
        %v1071 = vpop.permute.xlu0 %1070
        %v1080 = vsel %vm486, %v841, %v864
        %v1081 = vsel %vm486, %v819, %v866
        %v1082 = vsel %vm486, %v821, %v868
        %v1083 = vsel %vm486, %v823, %v870
        %v1084 = vsel %vm486, %v825, %v872
        %v1085 = vsel %vm486, %v827, %v874
        %v1086 = vsel %vm486, %v829, %v876
        %v1087 = vsel %vm486, %v831, %v878
        %vm1088 = vcmask 523264
        %v1089 = vsel %vm1088, %v1080, %v906
        %v1090 = vsel %vm1088, %v1081, %v908
        %v1091 = vsel %vm1088, %v1082, %v910
        %v1092 = vsel %vm1088, %v1083, %v912
        %v1093 = vsel %vm1088, %v1084, %v914
        %v1094 = vsel %vm1088, %v1085, %v916
        %v1095 = vsel %vm1088, %v1086, %v918
        %v1096 = vsel %vm1088, %v1087, %v920
        %vm1097 = vcmask 785408
        %v1098 = vsel %vm1097, %v1089, %v948
        %v1099 = vsel %vm1097, %v1090, %v950
        %v1100 = vsel %vm1097, %v1091, %v952
        %v1101 = vsel %vm1097, %v1092, %v954
        %v1102 = vsel %vm1097, %v1093, %v956
        %v1103 = vsel %vm1097, %v1094, %v958
        %v1104 = vsel %vm1097, %v1095, %v960
        %v1105 = vsel %vm1097, %v1096, %v962
        %v1106 = vsel %vm486, %v974, %v1015
        %v1107 = vsel %vm486, %v976, %v1017
        %v1108 = vsel %vm486, %v978, %v1019
        %v1109 = vsel %vm486, %v980, %v1021
        %v1110 = vsel %vm486, %v982, %v1023
        %v1111 = vsel %vm486, %v984, %v1025
        %v1112 = vsel %vm486, %v986, %v1027
        %v1113 = vsel %vm486, %v988, %v1029
        %v1114 = vsel %vm1088, %v1106, %v1057
        %v1115 = vsel %vm1088, %v1107, %v1059
        %v1116 = vsel %vm1088, %v1108, %v1061
        %v1117 = vsel %vm1088, %v1109, %v1063
        %v1118 = vsel %vm1088, %v1110, %v1065
        %v1119 = vsel %vm1088, %v1111, %v1067
        %v1120 = vsel %vm1088, %v1112, %v1069
        %v1121 = vsel %vm1088, %v1113, %v1071
        %v1123 = vperm.slane %v690, 0
        %v1126 = vsel %vm1097, %v1114, 0
        %v1129 = vsel %vm1097, %v1115, 0
        %v1132 = vsel %vm1097, %v1116, 0
        %v1135 = vsel %vm1097, %v1117, 0
        %v1138 = vsel %vm1097, %v1118, 0
        %v1141 = vsel %vm1097, %v1119, 0
        %v1144 = vsel %vm1097, %v1120, 0
        %v1147 = vsel %vm1097, %v1121, 0
        %1149 = vmatpush.msra.mxu0 %v677
        %1150 = vmatpush.msra.mxu0 %v676
        %1151 = vmatpush.msra.mxu0 %v675
        %1152 = vmatpush.msra.mxu0 %v674
        %1153 = vmatpush.msra.mxu0 %v673
        %1154 = vmatpush.msra.mxu0 %v672
        %1155 = vmatpush.msra.mxu0 %v671
        %1156 = vmatpush.msra.mxu0 %v670
        %1157 = vmatpush.msra.mxu0 %v669
        %1158 = vmatpush.msra.mxu0 %v668
        %1159 = vmatpush.msra.mxu0 %v667
        %1160 = vmatpush.msra.mxu0 %v666
        %1161 = vmatpush.msra.mxu0 %v665
        %1162 = vmatpush.msra.mxu0 %v664
        %1163 = vmatpush.msra.mxu0 %v663
        %1164 = vmatpush.msra.mxu0 %v662
        %1165 = vmatmul.f32.gmra.mxu0 %v1098
        %v1166 = vpop.f32.mrf.mxu0
        %v1167 = vadd.f32 %v1123, %v1166
        %1168 = vmatmul.f32.gmra.mxu0 %v1099
        %v1169 = vpop.f32.mrf.mxu0
        %v1170 = vadd.f32 %v1123, %v1169
        %1171 = vmatmul.f32.gmra.mxu0 %v1100
        %v1172 = vpop.f32.mrf.mxu0
        %v1173 = vadd.f32 %v1123, %v1172
        %1174 = vmatmul.f32.gmra.mxu0 %v1101
        %v1175 = vpop.f32.mrf.mxu0
        %v1176 = vadd.f32 %v1123, %v1175
        %1177 = vmatmul.f32.gmra.mxu0 %v1102
        %v1178 = vpop.f32.mrf.mxu0
        %v1179 = vadd.f32 %v1123, %v1178
        %1180 = vmatmul.f32.gmra.mxu0 %v1103
        %v1181 = vpop.f32.mrf.mxu0
        %v1182 = vadd.f32 %v1123, %v1181
        %1183 = vmatmul.f32.gmra.mxu0 %v1104
        %v1184 = vpop.f32.mrf.mxu0
        %v1185 = vadd.f32 %v1123, %v1184
        %1186 = vmatmul.f32.gmra.mxu0 %v1105
        %v1187 = vpop.f32.mrf.mxu0
        %v1188 = vadd.f32 %v1123, %v1187
        %1189 = vdwg.mxu0
        %1190 = vmatpush.msra.mxu0 0.0
        %1191 = vmatpush.msra.mxu0 0.0
        %1192 = vmatpush.msra.mxu0 0.0
        %1193 = vmatpush.msra.mxu0 0.0
        %1194 = vmatpush.msra.mxu0 %v689
        %1195 = vmatpush.msra.mxu0 %v688
        %1196 = vmatpush.msra.mxu0 %v687
        %1197 = vmatpush.msra.mxu0 %v686
        %1198 = vmatpush.msra.mxu0 %v685
        %1199 = vmatpush.msra.mxu0 %v684
        %1200 = vmatpush.msra.mxu0 %v683
        %1201 = vmatpush.msra.mxu0 %v682
        %1202 = vmatpush.msra.mxu0 %v681
        %1203 = vmatpush.msra.mxu0 %v680
        %1204 = vmatpush.msra.mxu0 %v679
        %1205 = vmatpush.msra.mxu0 %v678
        %1206 = vmatmul.f32.gmra.mxu0 %v1126
        %v1207 = vpop.f32.mrf.mxu0
        %v1208 = vadd.f32 %v1167, %v1207
        %1209 = vmatmul.f32.gmra.mxu0 %v1129
        %v1210 = vpop.f32.mrf.mxu0
        %v1211 = vadd.f32 %v1170, %v1210
        %1212 = vmatmul.f32.gmra.mxu0 %v1132
        %v1213 = vpop.f32.mrf.mxu0
        %v1214 = vadd.f32 %v1173, %v1213
        %1215 = vmatmul.f32.gmra.mxu0 %v1135
        %v1216 = vpop.f32.mrf.mxu0
        %v1217 = vadd.f32 %v1176, %v1216
        %1218 = vmatmul.f32.gmra.mxu0 %v1138
        %v1219 = vpop.f32.mrf.mxu0
        %v1220 = vadd.f32 %v1179, %v1219
        %1221 = vmatmul.f32.gmra.mxu0 %v1141
        %v1222 = vpop.f32.mrf.mxu0
        %v1223 = vadd.f32 %v1182, %v1222
        %1224 = vmatmul.f32.gmra.mxu0 %v1144
        %v1225 = vpop.f32.mrf.mxu0
        %v1226 = vadd.f32 %v1185, %v1225
        %1227 = vmatmul.f32.gmra.mxu0 %v1147
        %v1228 = vpop.f32.mrf.mxu0
        %v1229 = vadd.f32 %v1188, %v1228
        %1230 = vdwg.mxu0
        %vm1231 = vcmp.gt.f32.partialorder %v1208, 0.0
        %vm1232 = vcmp.gt.f32.partialorder %v1211, 0.0
        %vm1233 = vcmp.gt.f32.partialorder %v1214, 0.0
        %vm1234 = vcmp.gt.f32.partialorder %v1217, 0.0
        %vm1235 = vcmp.gt.f32.partialorder %v1220, 0.0
        %vm1236 = vcmp.gt.f32.partialorder %v1223, 0.0
        %vm1237 = vcmp.gt.f32.partialorder %v1226, 0.0
        %vm1238 = vcmp.gt.f32.partialorder %v1229, 0.0
        %v1239 = vmul.f32 %v1208, 0.2
        %v1240 = vmul.f32 %v1211, 0.2
        %v1241 = vmul.f32 %v1214, 0.2
        %v1242 = vmul.f32 %v1217, 0.2
        %v1243 = vmul.f32 %v1220, 0.2
        %v1244 = vmul.f32 %v1223, 0.2
        %v1245 = vmul.f32 %v1226, 0.2
        %v1246 = vmul.f32 %v1229, 0.2
        %v1247 = vsel %vm1231, %v1208, %v1239
        %v1248 = vsel %vm1232, %v1211, %v1240
        %v1249 = vsel %vm1233, %v1214, %v1241
        %v1250 = vsel %vm1234, %v1217, %v1242
        %v1251 = vsel %vm1235, %v1220, %v1243
        %v1252 = vsel %vm1236, %v1223, %v1244
        %v1253 = vsel %vm1237, %v1226, %v1245
        %v1254 = vsel %vm1238, %v1229, %v1246
        %v1255 = vld [vmem:[#allocation6] sm:$0xff]
        %v1256 = vld [vmem:[#allocation6 + $0x8] sm:$0xff]
        %v1257 = vld [vmem:[#allocation6 + $0x10] sm:$0xff]
        %v1258 = vld [vmem:[#allocation6 + $0x18] sm:$0xff]
        %v1259 = vld [vmem:[#allocation6 + $0x20] sm:$0xff]
        %v1260 = vld [vmem:[#allocation6 + $0x28] sm:$0xff]
        %v1261 = vld [vmem:[#allocation6 + $0x30] sm:$0xff]
        %v1262 = vld [vmem:[#allocation6 + $0x38] sm:$0xff]
        %v1263 = vld [vmem:[#allocation6 + $0x40] sm:$0xff]
        %v1264 = vld [vmem:[#allocation6 + $0x48] sm:$0xff]
        %v1265 = vld [vmem:[#allocation6 + $0x50] sm:$0xff]
        %v1266 = vld [vmem:[#allocation6 + $0x58] sm:$0xff]
        %v1267 = vld [vmem:[#allocation6 + $0x60] sm:$0xff]
        %v1268 = vld [vmem:[#allocation6 + $0x68] sm:$0xff]
        %v1269 = vld [vmem:[#allocation6 + $0x70] sm:$0xff]
        %v1270 = vld [vmem:[#allocation6 + $0x78] sm:$0xff]
        %v1271 = vld [vmem:[#allocation6 + $0x80] sm:$0xff]
        %v1272 = vld [vmem:[#allocation6 + $0x88] sm:$0xff]
        %v1273 = vld [vmem:[#allocation6 + $0x90] sm:$0xff]
        %v1274 = vld [vmem:[#allocation6 + $0x98] sm:$0xff]
        %v1275 = vld [vmem:[#allocation6 + $0xa0] sm:$0xff]
        %v1276 = vld [vmem:[#allocation6 + $0xa8] sm:$0xff]
        %v1277 = vld [vmem:[#allocation6 + $0xb0] sm:$0xff]
        %v1278 = vld [vmem:[#allocation6 + $0xb8] sm:$0xff]
        %v1279 = vld [vmem:[#allocation6 + $0xc0] sm:$0xff]
        %v1280 = vld [vmem:[#allocation6 + $0xc8] sm:$0xff]
        %v1281 = vld [vmem:[#allocation6 + $0xd0] sm:$0xff]
        %v1282 = vld [vmem:[#allocation6 + $0xd8] sm:$0xff]
        %v1283 = vld [vmem:[%s10] sm:$0x1]
        %v1284 = vadd.s32 %v692, 64
        %v1285 = vadd.s32 %v692, 72
        %v1286 = vadd.s32 %v692, 80
        %v1287 = vadd.s32 %v692, 88
        %v1288 = vadd.s32 %v692, 96
        %v1289 = vadd.s32 %v692, 104
        %v1290 = vadd.s32 %v692, 112
        %v1291 = vadd.s32 %v692, 120
        %v1292 = vsub.s32 %v1284, %v702
        %v1293 = vsub.s32 %v1285, %v702
        %v1294 = vsub.s32 %v1286, %v702
        %v1295 = vsub.s32 %v1287, %v702
        %v1296 = vsub.s32 %v1288, %v702
        %v1297 = vsub.s32 %v1289, %v702
        %v1298 = vsub.s32 %v1290, %v702
        %v1299 = vsub.s32 %v1291, %v702
        %vm1300 = vcmp.ge.s32.totalorder %v1292, 0
        %vm1301 = vcmp.ge.s32.totalorder %v1293, 0
        %vm1302 = vcmp.ge.s32.totalorder %v1294, 0
        %vm1303 = vcmp.ge.s32.totalorder %v1295, 0
        %vm1304 = vcmp.ge.s32.totalorder %v1296, 0
        %vm1305 = vcmp.ge.s32.totalorder %v1297, 0
        %vm1306 = vcmp.ge.s32.totalorder %v1298, 0
        %vm1307 = vcmp.ge.s32.totalorder %v1299, 0
        %vm1308 = vcmp.le.s32.totalorder %v1292, 1
        %vm1309 = vcmp.le.s32.totalorder %v1293, 1
        %vm1310 = vcmp.le.s32.totalorder %v1294, 1
        %vm1311 = vcmp.le.s32.totalorder %v1295, 1
        %vm1312 = vcmp.le.s32.totalorder %v1296, 1
        %vm1313 = vcmp.le.s32.totalorder %v1297, 1
        %vm1314 = vcmp.le.s32.totalorder %v1298, 1
        %vm1315 = vcmp.le.s32.totalorder %v1299, 1
        %vm1316 = vmand %vm1300, %vm1308
        %vm1317 = vmand %vm1301, %vm1309
        %vm1318 = vmand %vm1302, %vm1310
        %vm1319 = vmand %vm1303, %vm1311
        %vm1320 = vmand %vm1304, %vm1312
        %vm1321 = vmand %vm1305, %vm1313
        %vm1322 = vmand %vm1306, %vm1314
        %vm1323 = vmand %vm1307, %vm1315
        %v1324 = vsel %vm1316, 1.0, 0.0
        %v1325 = vsel %vm1317, 1.0, 0.0
        %v1326 = vsel %vm1318, 1.0, 0.0
        %v1327 = vsel %vm1319, 1.0, 0.0
        %v1328 = vsel %vm1320, 1.0, 0.0
        %v1329 = vsel %vm1321, 1.0, 0.0
        %v1330 = vsel %vm1322, 1.0, 0.0
        %v1331 = vsel %vm1323, 1.0, 0.0
        %v1332 = vsel %vm1088, %v735, 0
        %v1334 = vsel %vm1088, %v736, 0
        %v1336 = vsel %vm1088, %v737, 0
        %v1338 = vsel %vm1088, %v738, 0
        %v1340 = vsel %vm1088, %v739, 0
        %v1342 = vsel %vm1088, %v740, 0
        %v1344 = vsel %vm1088, %v741, 0
        %v1346 = vsel %vm1088, %v742, 0
        %v1349 = vsel %vm1088, %v1324, 0
        %v1352 = vsel %vm1088, %v1325, 0
        %v1355 = vsel %vm1088, %v1326, 0
        %v1358 = vsel %vm1088, %v1327, 0
        %v1361 = vsel %vm1088, %v1328, 0
        %v1364 = vsel %vm1088, %v1329, 0
        %v1367 = vsel %vm1088, %v1330, 0
        %v1370 = vsel %vm1088, %v1331, 0
        %1372 = vmatpush.msra.mxu0 0.0
        %1373 = vmatpush.msra.mxu0 0.0
        %1374 = vmatpush.msra.mxu0 0.0
        %1375 = vmatpush.msra.mxu0 0.0
        %1376 = vmatpush.msra.mxu0 0.0
        %1377 = vmatpush.msra.mxu0 0.0
        %1378 = vmatpush.msra.mxu0 0.0
        %1379 = vmatpush.msra.mxu0 0.0
        %1380 = vmatpush.msra.mxu0 %v1254
        %1381 = vmatpush.msra.mxu0 %v1253
        %1382 = vmatpush.msra.mxu0 %v1252
        %1383 = vmatpush.msra.mxu0 %v1251
        %1384 = vmatpush.msra.mxu0 %v1250
        %1385 = vmatpush.msra.mxu0 %v1249
        %1386 = vmatpush.msra.mxu0 %v1248
        %1387 = vmatpush.msra.mxu0 %v1247
        %1388 = vmatmul.f32.gmra.mxu0 %v1332
        %v1389 = vpop.f32.mrf.mxu0
        %v1390 = vadd.f32 0.0, %v1389
        %1391 = vmatmul.f32.gmra.mxu0 %v1334
        %v1392 = vpop.f32.mrf.mxu0
        %v1393 = vadd.f32 0.0, %v1392
        %1394 = vmatmul.f32.gmra.mxu0 %v1336
        %v1395 = vpop.f32.mrf.mxu0
        %v1396 = vadd.f32 0.0, %v1395
        %1397 = vmatmul.f32.gmra.mxu0 %v1338
        %v1398 = vpop.f32.mrf.mxu0
        %v1399 = vadd.f32 0.0, %v1398
        %1400 = vmatmul.f32.gmra.mxu0 %v1340
        %v1401 = vpop.f32.mrf.mxu0
        %v1402 = vadd.f32 0.0, %v1401
        %1403 = vmatmul.f32.gmra.mxu0 %v1342
        %v1404 = vpop.f32.mrf.mxu0
        %v1405 = vadd.f32 0.0, %v1404
        %1406 = vmatmul.f32.gmra.mxu0 %v1344
        %v1407 = vpop.f32.mrf.mxu0
        %v1408 = vadd.f32 0.0, %v1407
        %1409 = vmatmul.f32.gmra.mxu0 %v1346
        %v1410 = vpop.f32.mrf.mxu0
        %v1411 = vadd.f32 0.0, %v1410
        %1412 = vmatmul.f32.gmra.mxu0 %v1349
        %v1413 = vpop.f32.mrf.mxu0
        %v1414 = vadd.f32 0.0, %v1413
        %1415 = vmatmul.f32.gmra.mxu0 %v1352
        %v1416 = vpop.f32.mrf.mxu0
        %v1417 = vadd.f32 0.0, %v1416
        %1418 = vmatmul.f32.gmra.mxu0 %v1355
        %v1419 = vpop.f32.mrf.mxu0
        %v1420 = vadd.f32 0.0, %v1419
        %1421 = vmatmul.f32.gmra.mxu0 %v1358
        %v1422 = vpop.f32.mrf.mxu0
        %v1423 = vadd.f32 0.0, %v1422
        %1424 = vmatmul.f32.gmra.mxu0 %v1361
        %v1425 = vpop.f32.mrf.mxu0
        %v1426 = vadd.f32 0.0, %v1425
        %1427 = vmatmul.f32.gmra.mxu0 %v1364
        %v1428 = vpop.f32.mrf.mxu0
        %v1429 = vadd.f32 0.0, %v1428
        %1430 = vmatmul.f32.gmra.mxu0 %v1367
        %v1431 = vpop.f32.mrf.mxu0
        %v1432 = vadd.f32 0.0, %v1431
        %1433 = vmatmul.f32.gmra.mxu0 %v1370
        %v1434 = vpop.f32.mrf.mxu0
        %v1435 = vadd.f32 0.0, %v1434
        %1436 = vdwg.mxu0
        %v1453 = vrot.slane %v1390, 5
        %v1454 = vrot.slane %v1393, 5
        %v1455 = vsel %vm816, %v1453, %v1454
        %v1456 = vrot.slane %v1396, 5
        %v1457 = vsel %vm816, %v1454, %v1456
        %v1458 = vrot.slane %v1399, 5
        %v1459 = vsel %vm816, %v1456, %v1458
        %v1460 = vrot.slane %v1402, 5
        %v1461 = vsel %vm816, %v1458, %v1460
        %v1462 = vrot.slane %v1405, 5
        %v1463 = vsel %vm816, %v1460, %v1462
        %v1464 = vrot.slane %v1408, 5
        %v1465 = vsel %vm816, %v1462, %v1464
        %v1466 = vrot.slane %v1411, 5
        %v1467 = vsel %vm816, %v1464, %v1466
        %v1468 = vrot.slane %v1414, 5
        %v1469 = vsel %vm816, %v1466, %v1468
        %v1470 = vrot.slane %v1417, 5
        %v1471 = vsel %vm816, %v1468, %v1470
        %v1472 = vrot.slane %v1420, 5
        %v1473 = vsel %vm816, %v1470, %v1472
        %v1474 = vrot.slane %v1423, 5
        %v1475 = vsel %vm816, %v1472, %v1474
        %v1476 = vrot.slane %v1426, 5
        %v1477 = vsel %vm816, %v1474, %v1476
        %v1478 = vrot.slane %v1429, 5
        %v1479 = vsel %vm816, %v1476, %v1478
        %v1480 = vrot.slane %v1432, 5
        %v1481 = vsel %vm816, %v1478, %v1480
        %v1482 = vrot.slane %v1435, 5
        %v1483 = vsel %vm816, %v1480, %v1482
        %v1501 = vsel %vm816, 0.0, %v1453
        %v1502 = vsel %vm816, %v1482, 0.0
        %v1505 = vrot.slane %v1501, 1
        %v1506 = vrot.slane %v1455, 1
        %v1507 = vsel %vm845, %v1505, %v1506
        %v1508 = vrot.slane %v1457, 1
        %v1509 = vsel %vm845, %v1506, %v1508
        %v1510 = vrot.slane %v1459, 1
        %v1511 = vsel %vm845, %v1508, %v1510
        %v1512 = vrot.slane %v1461, 1
        %v1513 = vsel %vm845, %v1510, %v1512
        %v1514 = vrot.slane %v1463, 1
        %v1515 = vsel %vm845, %v1512, %v1514
        %v1516 = vrot.slane %v1465, 1
        %v1517 = vsel %vm845, %v1514, %v1516
        %v1518 = vrot.slane %v1467, 1
        %v1519 = vsel %vm845, %v1516, %v1518
        %v1520 = vrot.slane %v1469, 1
        %v1521 = vsel %vm845, %v1518, %v1520
        %v1522 = vrot.slane %v1471, 1
        %v1523 = vsel %vm845, %v1520, %v1522
        %v1524 = vrot.slane %v1473, 1
        %v1525 = vsel %vm845, %v1522, %v1524
        %v1526 = vrot.slane %v1475, 1
        %v1527 = vsel %vm845, %v1524, %v1526
        %v1528 = vrot.slane %v1477, 1
        %v1529 = vsel %vm845, %v1526, %v1528
        %v1530 = vrot.slane %v1479, 1
        %v1531 = vsel %vm845, %v1528, %v1530
        %v1532 = vrot.slane %v1481, 1
        %v1533 = vsel %vm845, %v1530, %v1532
        %v1534 = vrot.slane %v1483, 1
        %v1535 = vsel %vm845, %v1532, %v1534
        %v1536 = vrot.slane %v1502, 1
        %v1537 = vsel %vm845, %v1534, %v1536
        %1538 = vrot.lane.b32.xlu0 %v1507, 32
        %v1539 = vpop.permute.xlu0 %1538
        %1540 = vrot.lane.b32.xlu0 %v1509, 32
        %v1541 = vpop.permute.xlu0 %1540
        %1542 = vrot.lane.b32.xlu0 %v1511, 32
        %v1543 = vpop.permute.xlu0 %1542
        %1544 = vrot.lane.b32.xlu0 %v1513, 32
        %v1545 = vpop.permute.xlu0 %1544
        %1546 = vrot.lane.b32.xlu0 %v1515, 32
        %v1547 = vpop.permute.xlu0 %1546
        %1548 = vrot.lane.b32.xlu0 %v1517, 32
        %v1549 = vpop.permute.xlu0 %1548
        %1550 = vrot.lane.b32.xlu0 %v1519, 32
        %v1551 = vpop.permute.xlu0 %1550
        %1552 = vrot.lane.b32.xlu0 %v1521, 32
        %v1553 = vpop.permute.xlu0 %1552
        %1554 = vrot.lane.b32.xlu0 %v1523, 32
        %v1555 = vpop.permute.xlu0 %1554
        %1556 = vrot.lane.b32.xlu0 %v1525, 32
        %v1557 = vpop.permute.xlu0 %1556
        %1558 = vrot.lane.b32.xlu0 %v1527, 32
        %v1559 = vpop.permute.xlu0 %1558
        %1560 = vrot.lane.b32.xlu0 %v1529, 32
        %v1561 = vpop.permute.xlu0 %1560
        %1562 = vrot.lane.b32.xlu0 %v1531, 32
        %v1563 = vpop.permute.xlu0 %1562
        %1564 = vrot.lane.b32.xlu0 %v1533, 32
        %v1565 = vpop.permute.xlu0 %1564
        %1566 = vrot.lane.b32.xlu0 %v1535, 32
        %v1567 = vpop.permute.xlu0 %1566
        %1568 = vrot.lane.b32.xlu0 %v1537, 32
        %v1569 = vpop.permute.xlu0 %1568
        %v1586 = vrot.slane %v1501, 2
        %v1587 = vrot.slane %v1455, 2
        %v1588 = vsel %vm887, %v1586, %v1587
        %v1589 = vrot.slane %v1457, 2
        %v1590 = vsel %vm887, %v1587, %v1589
        %v1591 = vrot.slane %v1459, 2
        %v1592 = vsel %vm887, %v1589, %v1591
        %v1593 = vrot.slane %v1461, 2
        %v1594 = vsel %vm887, %v1591, %v1593
        %v1595 = vrot.slane %v1463, 2
        %v1596 = vsel %vm887, %v1593, %v1595
        %v1597 = vrot.slane %v1465, 2
        %v1598 = vsel %vm887, %v1595, %v1597
        %v1599 = vrot.slane %v1467, 2
        %v1600 = vsel %vm887, %v1597, %v1599
        %v1601 = vrot.slane %v1469, 2
        %v1602 = vsel %vm887, %v1599, %v1601
        %v1603 = vrot.slane %v1471, 2
        %v1604 = vsel %vm887, %v1601, %v1603
        %v1605 = vrot.slane %v1473, 2
        %v1606 = vsel %vm887, %v1603, %v1605
        %v1607 = vrot.slane %v1475, 2
        %v1608 = vsel %vm887, %v1605, %v1607
        %v1609 = vrot.slane %v1477, 2
        %v1610 = vsel %vm887, %v1607, %v1609
        %v1611 = vrot.slane %v1479, 2
        %v1612 = vsel %vm887, %v1609, %v1611
        %v1613 = vrot.slane %v1481, 2
        %v1614 = vsel %vm887, %v1611, %v1613
        %v1615 = vrot.slane %v1483, 2
        %v1616 = vsel %vm887, %v1613, %v1615
        %v1617 = vrot.slane %v1502, 2
        %v1618 = vsel %vm887, %v1615, %v1617
        %1619 = vrot.lane.b32.xlu0 %v1588, 64
        %v1620 = vpop.permute.xlu0 %1619
        %1621 = vrot.lane.b32.xlu0 %v1590, 64
        %v1622 = vpop.permute.xlu0 %1621
        %1623 = vrot.lane.b32.xlu0 %v1592, 64
        %v1624 = vpop.permute.xlu0 %1623
        %1625 = vrot.lane.b32.xlu0 %v1594, 64
        %v1626 = vpop.permute.xlu0 %1625
        %1627 = vrot.lane.b32.xlu0 %v1596, 64
        %v1628 = vpop.permute.xlu0 %1627
        %1629 = vrot.lane.b32.xlu0 %v1598, 64
        %v1630 = vpop.permute.xlu0 %1629
        %1631 = vrot.lane.b32.xlu0 %v1600, 64
        %v1632 = vpop.permute.xlu0 %1631
        %1633 = vrot.lane.b32.xlu0 %v1602, 64
        %v1634 = vpop.permute.xlu0 %1633
        %1635 = vrot.lane.b32.xlu0 %v1604, 64
        %v1636 = vpop.permute.xlu0 %1635
        %1637 = vrot.lane.b32.xlu0 %v1606, 64
        %v1638 = vpop.permute.xlu0 %1637
        %1639 = vrot.lane.b32.xlu0 %v1608, 64
        %v1640 = vpop.permute.xlu0 %1639
        %1641 = vrot.lane.b32.xlu0 %v1610, 64
        %v1642 = vpop.permute.xlu0 %1641
        %1643 = vrot.lane.b32.xlu0 %v1612, 64
        %v1644 = vpop.permute.xlu0 %1643
        %1645 = vrot.lane.b32.xlu0 %v1614, 64
        %v1646 = vpop.permute.xlu0 %1645
        %1647 = vrot.lane.b32.xlu0 %v1616, 64
        %v1648 = vpop.permute.xlu0 %1647
        %1649 = vrot.lane.b32.xlu0 %v1618, 64
        %v1650 = vpop.permute.xlu0 %1649
        %v1667 = vrot.slane %v1501, 3
        %v1668 = vrot.slane %v1455, 3
        %v1669 = vsel %vm929, %v1667, %v1668
        %v1670 = vrot.slane %v1457, 3
        %v1671 = vsel %vm929, %v1668, %v1670
        %v1672 = vrot.slane %v1459, 3
        %v1673 = vsel %vm929, %v1670, %v1672
        %v1674 = vrot.slane %v1461, 3
        %v1675 = vsel %vm929, %v1672, %v1674
        %v1676 = vrot.slane %v1463, 3
        %v1677 = vsel %vm929, %v1674, %v1676
        %v1678 = vrot.slane %v1465, 3
        %v1679 = vsel %vm929, %v1676, %v1678
        %v1680 = vrot.slane %v1467, 3
        %v1681 = vsel %vm929, %v1678, %v1680
        %v1682 = vrot.slane %v1469, 3
        %v1683 = vsel %vm929, %v1680, %v1682
        %v1684 = vrot.slane %v1471, 3
        %v1685 = vsel %vm929, %v1682, %v1684
        %v1686 = vrot.slane %v1473, 3
        %v1687 = vsel %vm929, %v1684, %v1686
        %v1688 = vrot.slane %v1475, 3
        %v1689 = vsel %vm929, %v1686, %v1688
        %v1690 = vrot.slane %v1477, 3
        %v1691 = vsel %vm929, %v1688, %v1690
        %v1692 = vrot.slane %v1479, 3
        %v1693 = vsel %vm929, %v1690, %v1692
        %v1694 = vrot.slane %v1481, 3
        %v1695 = vsel %vm929, %v1692, %v1694
        %v1696 = vrot.slane %v1483, 3
        %v1697 = vsel %vm929, %v1694, %v1696
        %v1698 = vrot.slane %v1502, 3
        %v1699 = vsel %vm929, %v1696, %v1698
        %1700 = vrot.lane.b32.xlu0 %v1669, 96
        %v1701 = vpop.permute.xlu0 %1700
        %1702 = vrot.lane.b32.xlu0 %v1671, 96
        %v1703 = vpop.permute.xlu0 %1702
        %1704 = vrot.lane.b32.xlu0 %v1673, 96
        %v1705 = vpop.permute.xlu0 %1704
        %1706 = vrot.lane.b32.xlu0 %v1675, 96
        %v1707 = vpop.permute.xlu0 %1706
        %1708 = vrot.lane.b32.xlu0 %v1677, 96
        %v1709 = vpop.permute.xlu0 %1708
        %1710 = vrot.lane.b32.xlu0 %v1679, 96
        %v1711 = vpop.permute.xlu0 %1710
        %1712 = vrot.lane.b32.xlu0 %v1681, 96
        %v1713 = vpop.permute.xlu0 %1712
        %1714 = vrot.lane.b32.xlu0 %v1683, 96
        %v1715 = vpop.permute.xlu0 %1714
        %1716 = vrot.lane.b32.xlu0 %v1685, 96
        %v1717 = vpop.permute.xlu0 %1716
        %1718 = vrot.lane.b32.xlu0 %v1687, 96
        %v1719 = vpop.permute.xlu0 %1718
        %1720 = vrot.lane.b32.xlu0 %v1689, 96
        %v1721 = vpop.permute.xlu0 %1720
        %1722 = vrot.lane.b32.xlu0 %v1691, 96
        %v1723 = vpop.permute.xlu0 %1722
        %1724 = vrot.lane.b32.xlu0 %v1693, 96
        %v1725 = vpop.permute.xlu0 %1724
        %1726 = vrot.lane.b32.xlu0 %v1695, 96
        %v1727 = vpop.permute.xlu0 %1726
        %1728 = vrot.lane.b32.xlu0 %v1697, 96
        %v1729 = vpop.permute.xlu0 %1728
        %1730 = vrot.lane.b32.xlu0 %v1699, 96
        %v1731 = vpop.permute.xlu0 %1730
        %v1748 = vrot.slane %v1501, 4
        %v1749 = vrot.slane %v1455, 4
        %v1750 = vsel %vm971, %v1748, %v1749
        %v1751 = vrot.slane %v1457, 4
        %v1752 = vsel %vm971, %v1749, %v1751
        %v1753 = vrot.slane %v1459, 4
        %v1754 = vsel %vm971, %v1751, %v1753
        %v1755 = vrot.slane %v1461, 4
        %v1756 = vsel %vm971, %v1753, %v1755
        %v1757 = vrot.slane %v1463, 4
        %v1758 = vsel %vm971, %v1755, %v1757
        %v1759 = vrot.slane %v1465, 4
        %v1760 = vsel %vm971, %v1757, %v1759
        %v1761 = vrot.slane %v1467, 4
        %v1762 = vsel %vm971, %v1759, %v1761
        %v1763 = vrot.slane %v1469, 4
        %v1764 = vsel %vm971, %v1761, %v1763
        %v1765 = vrot.slane %v1471, 4
        %v1766 = vsel %vm971, %v1763, %v1765
        %v1767 = vrot.slane %v1473, 4
        %v1768 = vsel %vm971, %v1765, %v1767
        %v1769 = vrot.slane %v1475, 4
        %v1770 = vsel %vm971, %v1767, %v1769
        %v1771 = vrot.slane %v1477, 4
        %v1772 = vsel %vm971, %v1769, %v1771
        %v1773 = vrot.slane %v1479, 4
        %v1774 = vsel %vm971, %v1771, %v1773
        %v1775 = vrot.slane %v1481, 4
        %v1776 = vsel %vm971, %v1773, %v1775
        %v1777 = vrot.slane %v1483, 4
        %v1778 = vsel %vm971, %v1775, %v1777
        %v1779 = vrot.slane %v1502, 4
        %v1780 = vsel %vm971, %v1777, %v1779
        %v1797 = vrot.slane %v1501, 5
        %v1798 = vrot.slane %v1455, 5
        %v1799 = vsel %vm816, %v1797, %v1798
        %v1800 = vrot.slane %v1457, 5
        %v1801 = vsel %vm816, %v1798, %v1800
        %v1802 = vrot.slane %v1459, 5
        %v1803 = vsel %vm816, %v1800, %v1802
        %v1804 = vrot.slane %v1461, 5
        %v1805 = vsel %vm816, %v1802, %v1804
        %v1806 = vrot.slane %v1463, 5
        %v1807 = vsel %vm816, %v1804, %v1806
        %v1808 = vrot.slane %v1465, 5
        %v1809 = vsel %vm816, %v1806, %v1808
        %v1810 = vrot.slane %v1467, 5
        %v1811 = vsel %vm816, %v1808, %v1810
        %v1812 = vrot.slane %v1469, 5
        %v1813 = vsel %vm816, %v1810, %v1812
        %v1814 = vrot.slane %v1471, 5
        %v1815 = vsel %vm816, %v1812, %v1814
        %v1816 = vrot.slane %v1473, 5
        %v1817 = vsel %vm816, %v1814, %v1816
        %v1818 = vrot.slane %v1475, 5
        %v1819 = vsel %vm816, %v1816, %v1818
        %v1820 = vrot.slane %v1477, 5
        %v1821 = vsel %vm816, %v1818, %v1820
        %v1822 = vrot.slane %v1479, 5
        %v1823 = vsel %vm816, %v1820, %v1822
        %v1824 = vrot.slane %v1481, 5
        %v1825 = vsel %vm816, %v1822, %v1824
        %v1826 = vrot.slane %v1483, 5
        %v1827 = vsel %vm816, %v1824, %v1826
        %v1828 = vrot.slane %v1502, 5
        %v1829 = vsel %vm816, %v1826, %v1828
        %1830 = vrot.lane.b32.xlu0 %v1799, 32
        %v1831 = vpop.permute.xlu0 %1830
        %1832 = vrot.lane.b32.xlu0 %v1801, 32
        %v1833 = vpop.permute.xlu0 %1832
        %1834 = vrot.lane.b32.xlu0 %v1803, 32
        %v1835 = vpop.permute.xlu0 %1834
        %1836 = vrot.lane.b32.xlu0 %v1805, 32
        %v1837 = vpop.permute.xlu0 %1836
        %1838 = vrot.lane.b32.xlu0 %v1807, 32
        %v1839 = vpop.permute.xlu0 %1838
        %1840 = vrot.lane.b32.xlu0 %v1809, 32
        %v1841 = vpop.permute.xlu0 %1840
        %1842 = vrot.lane.b32.xlu0 %v1811, 32
        %v1843 = vpop.permute.xlu0 %1842
        %1844 = vrot.lane.b32.xlu0 %v1813, 32
        %v1845 = vpop.permute.xlu0 %1844
        %1846 = vrot.lane.b32.xlu0 %v1815, 32
        %v1847 = vpop.permute.xlu0 %1846
        %1848 = vrot.lane.b32.xlu0 %v1817, 32
        %v1849 = vpop.permute.xlu0 %1848
        %1850 = vrot.lane.b32.xlu0 %v1819, 32
        %v1851 = vpop.permute.xlu0 %1850
        %1852 = vrot.lane.b32.xlu0 %v1821, 32
        %v1853 = vpop.permute.xlu0 %1852
        %1854 = vrot.lane.b32.xlu0 %v1823, 32
        %v1855 = vpop.permute.xlu0 %1854
        %1856 = vrot.lane.b32.xlu0 %v1825, 32
        %v1857 = vpop.permute.xlu0 %1856
        %1858 = vrot.lane.b32.xlu0 %v1827, 32
        %v1859 = vpop.permute.xlu0 %1858
        %1860 = vrot.lane.b32.xlu0 %v1829, 32
        %v1861 = vpop.permute.xlu0 %1860
        %v1878 = vrot.slane %v1501, 6
        %v1879 = vrot.slane %v1455, 6
        %v1880 = vsel %vm1038, %v1878, %v1879
        %v1881 = vrot.slane %v1457, 6
        %v1882 = vsel %vm1038, %v1879, %v1881
        %v1883 = vrot.slane %v1459, 6
        %v1884 = vsel %vm1038, %v1881, %v1883
        %v1885 = vrot.slane %v1461, 6
        %v1886 = vsel %vm1038, %v1883, %v1885
        %v1887 = vrot.slane %v1463, 6
        %v1888 = vsel %vm1038, %v1885, %v1887
        %v1889 = vrot.slane %v1465, 6
        %v1890 = vsel %vm1038, %v1887, %v1889
        %v1891 = vrot.slane %v1467, 6
        %v1892 = vsel %vm1038, %v1889, %v1891
        %v1893 = vrot.slane %v1469, 6
        %v1894 = vsel %vm1038, %v1891, %v1893
        %v1895 = vrot.slane %v1471, 6
        %v1896 = vsel %vm1038, %v1893, %v1895
        %v1897 = vrot.slane %v1473, 6
        %v1898 = vsel %vm1038, %v1895, %v1897
        %v1899 = vrot.slane %v1475, 6
        %v1900 = vsel %vm1038, %v1897, %v1899
        %v1901 = vrot.slane %v1477, 6
        %v1902 = vsel %vm1038, %v1899, %v1901
        %v1903 = vrot.slane %v1479, 6
        %v1904 = vsel %vm1038, %v1901, %v1903
        %v1905 = vrot.slane %v1481, 6
        %v1906 = vsel %vm1038, %v1903, %v1905
        %v1907 = vrot.slane %v1483, 6
        %v1908 = vsel %vm1038, %v1905, %v1907
        %v1909 = vrot.slane %v1502, 6
        %v1910 = vsel %vm1038, %v1907, %v1909
        %1911 = vrot.lane.b32.xlu0 %v1880, 64
        %v1912 = vpop.permute.xlu0 %1911
        %1913 = vrot.lane.b32.xlu0 %v1882, 64
        %v1914 = vpop.permute.xlu0 %1913
        %1915 = vrot.lane.b32.xlu0 %v1884, 64
        %v1916 = vpop.permute.xlu0 %1915
        %1917 = vrot.lane.b32.xlu0 %v1886, 64
        %v1918 = vpop.permute.xlu0 %1917
        %1919 = vrot.lane.b32.xlu0 %v1888, 64
        %v1920 = vpop.permute.xlu0 %1919
        %1921 = vrot.lane.b32.xlu0 %v1890, 64
        %v1922 = vpop.permute.xlu0 %1921
        %1923 = vrot.lane.b32.xlu0 %v1892, 64
        %v1924 = vpop.permute.xlu0 %1923
        %1925 = vrot.lane.b32.xlu0 %v1894, 64
        %v1926 = vpop.permute.xlu0 %1925
        %1927 = vrot.lane.b32.xlu0 %v1896, 64
        %v1928 = vpop.permute.xlu0 %1927
        %1929 = vrot.lane.b32.xlu0 %v1898, 64
        %v1930 = vpop.permute.xlu0 %1929
        %1931 = vrot.lane.b32.xlu0 %v1900, 64
        %v1932 = vpop.permute.xlu0 %1931
        %1933 = vrot.lane.b32.xlu0 %v1902, 64
        %v1934 = vpop.permute.xlu0 %1933
        %1935 = vrot.lane.b32.xlu0 %v1904, 64
        %v1936 = vpop.permute.xlu0 %1935
        %1937 = vrot.lane.b32.xlu0 %v1906, 64
        %v1938 = vpop.permute.xlu0 %1937
        %1939 = vrot.lane.b32.xlu0 %v1908, 64
        %v1940 = vpop.permute.xlu0 %1939
        %1941 = vrot.lane.b32.xlu0 %v1910, 64
        %v1942 = vpop.permute.xlu0 %1941
        %v1959 = vsel %vm486, %v1501, %v1539
        %v1960 = vsel %vm486, %v1455, %v1541
        %v1961 = vsel %vm486, %v1457, %v1543
        %v1962 = vsel %vm486, %v1459, %v1545
        %v1963 = vsel %vm486, %v1461, %v1547
        %v1964 = vsel %vm486, %v1463, %v1549
        %v1965 = vsel %vm486, %v1465, %v1551
        %v1966 = vsel %vm486, %v1467, %v1553
        %v1967 = vsel %vm486, %v1469, %v1555
        %v1968 = vsel %vm486, %v1471, %v1557
        %v1969 = vsel %vm486, %v1473, %v1559
        %v1970 = vsel %vm486, %v1475, %v1561
        %v1971 = vsel %vm486, %v1477, %v1563
        %v1972 = vsel %vm486, %v1479, %v1565
        %v1973 = vsel %vm486, %v1481, %v1567
        %v1974 = vsel %vm486, %v1483, %v1569
        %v1975 = vsel %vm1088, %v1959, %v1620
        %v1976 = vsel %vm1088, %v1960, %v1622
        %v1977 = vsel %vm1088, %v1961, %v1624
        %v1978 = vsel %vm1088, %v1962, %v1626
        %v1979 = vsel %vm1088, %v1963, %v1628
        %v1980 = vsel %vm1088, %v1964, %v1630
        %v1981 = vsel %vm1088, %v1965, %v1632
        %v1982 = vsel %vm1088, %v1966, %v1634
        %v1983 = vsel %vm1088, %v1967, %v1636
        %v1984 = vsel %vm1088, %v1968, %v1638
        %v1985 = vsel %vm1088, %v1969, %v1640
        %v1986 = vsel %vm1088, %v1970, %v1642
        %v1987 = vsel %vm1088, %v1971, %v1644
        %v1988 = vsel %vm1088, %v1972, %v1646
        %v1989 = vsel %vm1088, %v1973, %v1648
        %v1990 = vsel %vm1088, %v1974, %v1650
        %v1991 = vsel %vm1097, %v1975, %v1701
        %v1992 = vsel %vm1097, %v1976, %v1703
        %v1993 = vsel %vm1097, %v1977, %v1705
        %v1994 = vsel %vm1097, %v1978, %v1707
        %v1995 = vsel %vm1097, %v1979, %v1709
        %v1996 = vsel %vm1097, %v1980, %v1711
        %v1997 = vsel %vm1097, %v1981, %v1713
        %v1998 = vsel %vm1097, %v1982, %v1715
        %v1999 = vsel %vm1097, %v1983, %v1717
        %v2000 = vsel %vm1097, %v1984, %v1719
        %v2001 = vsel %vm1097, %v1985, %v1721
        %v2002 = vsel %vm1097, %v1986, %v1723
        %v2003 = vsel %vm1097, %v1987, %v1725
        %v2004 = vsel %vm1097, %v1988, %v1727
        %v2005 = vsel %vm1097, %v1989, %v1729
        %v2006 = vsel %vm1097, %v1990, %v1731
        %v2007 = vsel %vm486, %v1750, %v1831
        %v2008 = vsel %vm486, %v1752, %v1833
        %v2009 = vsel %vm486, %v1754, %v1835
        %v2010 = vsel %vm486, %v1756, %v1837
        %v2011 = vsel %vm486, %v1758, %v1839
        %v2012 = vsel %vm486, %v1760, %v1841
        %v2013 = vsel %vm486, %v1762, %v1843
        %v2014 = vsel %vm486, %v1764, %v1845
        %v2015 = vsel %vm486, %v1766, %v1847
        %v2016 = vsel %vm486, %v1768, %v1849
        %v2017 = vsel %vm486, %v1770, %v1851
        %v2018 = vsel %vm486, %v1772, %v1853
        %v2019 = vsel %vm486, %v1774, %v1855
        %v2020 = vsel %vm486, %v1776, %v1857
        %v2021 = vsel %vm486, %v1778, %v1859
        %v2022 = vsel %vm486, %v1780, %v1861
        %v2023 = vsel %vm1088, %v2007, %v1912
        %v2024 = vsel %vm1088, %v2008, %v1914
        %v2025 = vsel %vm1088, %v2009, %v1916
        %v2026 = vsel %vm1088, %v2010, %v1918
        %v2027 = vsel %vm1088, %v2011, %v1920
        %v2028 = vsel %vm1088, %v2012, %v1922
        %v2029 = vsel %vm1088, %v2013, %v1924
        %v2030 = vsel %vm1088, %v2014, %v1926
        %v2031 = vsel %vm1088, %v2015, %v1928
        %v2032 = vsel %vm1088, %v2016, %v1930
        %v2033 = vsel %vm1088, %v2017, %v1932
        %v2034 = vsel %vm1088, %v2018, %v1934
        %v2035 = vsel %vm1088, %v2019, %v1936
        %v2036 = vsel %vm1088, %v2020, %v1938
        %v2037 = vsel %vm1088, %v2021, %v1940
        %v2038 = vsel %vm1088, %v2022, %v1942
        %v2040 = vperm.slane %v1283, 0
        %v2043 = vsel %vm1097, %v2023, 0
        %v2046 = vsel %vm1097, %v2024, 0
        %v2049 = vsel %vm1097, %v2025, 0
        %v2052 = vsel %vm1097, %v2026, 0
        %v2055 = vsel %vm1097, %v2027, 0
        %v2058 = vsel %vm1097, %v2028, 0
        %v2061 = vsel %vm1097, %v2029, 0
        %v2064 = vsel %vm1097, %v2030, 0
        %v2067 = vsel %vm1097, %v2031, 0
        %v2070 = vsel %vm1097, %v2032, 0
        %v2073 = vsel %vm1097, %v2033, 0
        %v2076 = vsel %vm1097, %v2034, 0
        %v2079 = vsel %vm1097, %v2035, 0
        %v2082 = vsel %vm1097, %v2036, 0
        %v2085 = vsel %vm1097, %v2037, 0
        %v2088 = vsel %vm1097, %v2038, 0
        %2090 = vmatpush.msra.mxu0 %v1270
        %2091 = vmatpush.msra.mxu0 %v1269
        %2092 = vmatpush.msra.mxu0 %v1268
        %2093 = vmatpush.msra.mxu0 %v1267
        %2094 = vmatpush.msra.mxu0 %v1266
        %2095 = vmatpush.msra.mxu0 %v1265
        %2096 = vmatpush.msra.mxu0 %v1264
        %2097 = vmatpush.msra.mxu0 %v1263
        %2098 = vmatpush.msra.mxu0 %v1262
        %2099 = vmatpush.msra.mxu0 %v1261
        %2100 = vmatpush.msra.mxu0 %v1260
        %2101 = vmatpush.msra.mxu0 %v1259
        %2102 = vmatpush.msra.mxu0 %v1258
        %2103 = vmatpush.msra.mxu0 %v1257
        %2104 = vmatpush.msra.mxu0 %v1256
        %2105 = vmatpush.msra.mxu0 %v1255
        %2106 = vmatmul.f32.gmra.mxu0 %v1991
        %v2107 = vpop.f32.mrf.mxu0
        %v2108 = vadd.f32 %v2040, %v2107
        %2109 = vmatmul.f32.gmra.mxu0 %v1992
        %v2110 = vpop.f32.mrf.mxu0
        %v2111 = vadd.f32 %v2040, %v2110
        %2112 = vmatmul.f32.gmra.mxu0 %v1993
        %v2113 = vpop.f32.mrf.mxu0
        %v2114 = vadd.f32 %v2040, %v2113
        %2115 = vmatmul.f32.gmra.mxu0 %v1994
        %v2116 = vpop.f32.mrf.mxu0
        %v2117 = vadd.f32 %v2040, %v2116
        %2118 = vmatmul.f32.gmra.mxu0 %v1995
        %v2119 = vpop.f32.mrf.mxu0
        %v2120 = vadd.f32 %v2040, %v2119
        %2121 = vmatmul.f32.gmra.mxu0 %v1996
        %v2122 = vpop.f32.mrf.mxu0
        %v2123 = vadd.f32 %v2040, %v2122
        %2124 = vmatmul.f32.gmra.mxu0 %v1997
        %v2125 = vpop.f32.mrf.mxu0
        %v2126 = vadd.f32 %v2040, %v2125
        %2127 = vmatmul.f32.gmra.mxu0 %v1998
        %v2128 = vpop.f32.mrf.mxu0
        %v2129 = vadd.f32 %v2040, %v2128
        %2130 = vmatmul.f32.gmra.mxu0 %v1999
        %v2131 = vpop.f32.mrf.mxu0
        %v2132 = vadd.f32 %v2040, %v2131
        %2133 = vmatmul.f32.gmra.mxu0 %v2000
        %v2134 = vpop.f32.mrf.mxu0
        %v2135 = vadd.f32 %v2040, %v2134
        %2136 = vmatmul.f32.gmra.mxu0 %v2001
        %v2137 = vpop.f32.mrf.mxu0
        %v2138 = vadd.f32 %v2040, %v2137
        %2139 = vmatmul.f32.gmra.mxu0 %v2002
        %v2140 = vpop.f32.mrf.mxu0
        %v2141 = vadd.f32 %v2040, %v2140
        %2142 = vmatmul.f32.gmra.mxu0 %v2003
        %v2143 = vpop.f32.mrf.mxu0
        %v2144 = vadd.f32 %v2040, %v2143
        %2145 = vmatmul.f32.gmra.mxu0 %v2004
        %v2146 = vpop.f32.mrf.mxu0
        %v2147 = vadd.f32 %v2040, %v2146
        %2148 = vmatmul.f32.gmra.mxu0 %v2005
        %v2149 = vpop.f32.mrf.mxu0
        %v2150 = vadd.f32 %v2040, %v2149
        %2151 = vmatmul.f32.gmra.mxu0 %v2006
        %v2152 = vpop.f32.mrf.mxu0
        %v2153 = vadd.f32 %v2040, %v2152
        %2154 = vdwg.mxu0
        %2155 = vmatpush.msra.mxu0 0.0
        %2156 = vmatpush.msra.mxu0 0.0
        %2157 = vmatpush.msra.mxu0 0.0
        %2158 = vmatpush.msra.mxu0 0.0
        %2159 = vmatpush.msra.mxu0 %v1282
        %2160 = vmatpush.msra.mxu0 %v1281
        %2161 = vmatpush.msra.mxu0 %v1280
        %2162 = vmatpush.msra.mxu0 %v1279
        %2163 = vmatpush.msra.mxu0 %v1278
        %2164 = vmatpush.msra.mxu0 %v1277
        %2165 = vmatpush.msra.mxu0 %v1276
        %2166 = vmatpush.msra.mxu0 %v1275
        %2167 = vmatpush.msra.mxu0 %v1274
        %2168 = vmatpush.msra.mxu0 %v1273
        %2169 = vmatpush.msra.mxu0 %v1272
        %2170 = vmatpush.msra.mxu0 %v1271
        %2171 = vmatmul.f32.gmra.mxu0 %v2043
        %v2172 = vpop.f32.mrf.mxu0
        %v2173 = vadd.f32 %v2108, %v2172
        %2174 = vmatmul.f32.gmra.mxu0 %v2046
        %v2175 = vpop.f32.mrf.mxu0
        %v2176 = vadd.f32 %v2111, %v2175
        %2177 = vmatmul.f32.gmra.mxu0 %v2049
        %v2178 = vpop.f32.mrf.mxu0
        %v2179 = vadd.f32 %v2114, %v2178
        %2180 = vmatmul.f32.gmra.mxu0 %v2052
        %v2181 = vpop.f32.mrf.mxu0
        %v2182 = vadd.f32 %v2117, %v2181
        %2183 = vmatmul.f32.gmra.mxu0 %v2055
        %v2184 = vpop.f32.mrf.mxu0
        %v2185 = vadd.f32 %v2120, %v2184
        %2186 = vmatmul.f32.gmra.mxu0 %v2058
        %v2187 = vpop.f32.mrf.mxu0
        %v2188 = vadd.f32 %v2123, %v2187
        %2189 = vmatmul.f32.gmra.mxu0 %v2061
        %v2190 = vpop.f32.mrf.mxu0
        %v2191 = vadd.f32 %v2126, %v2190
        %2192 = vmatmul.f32.gmra.mxu0 %v2064
        %v2193 = vpop.f32.mrf.mxu0
        %v2194 = vadd.f32 %v2129, %v2193
        %2195 = vmatmul.f32.gmra.mxu0 %v2067
        %v2196 = vpop.f32.mrf.mxu0
        %v2197 = vadd.f32 %v2132, %v2196
        %2198 = vmatmul.f32.gmra.mxu0 %v2070
        %v2199 = vpop.f32.mrf.mxu0
        %v2200 = vadd.f32 %v2135, %v2199
        %2201 = vmatmul.f32.gmra.mxu0 %v2073
        %v2202 = vpop.f32.mrf.mxu0
        %v2203 = vadd.f32 %v2138, %v2202
        %2204 = vmatmul.f32.gmra.mxu0 %v2076
        %v2205 = vpop.f32.mrf.mxu0
        %v2206 = vadd.f32 %v2141, %v2205
        %2207 = vmatmul.f32.gmra.mxu0 %v2079
        %v2208 = vpop.f32.mrf.mxu0
        %v2209 = vadd.f32 %v2144, %v2208
        %2210 = vmatmul.f32.gmra.mxu0 %v2082
        %v2211 = vpop.f32.mrf.mxu0
        %v2212 = vadd.f32 %v2147, %v2211
        %2213 = vmatmul.f32.gmra.mxu0 %v2085
        %v2214 = vpop.f32.mrf.mxu0
        %v2215 = vadd.f32 %v2150, %v2214
        %2216 = vmatmul.f32.gmra.mxu0 %v2088
        %v2217 = vpop.f32.mrf.mxu0
        %v2218 = vadd.f32 %v2153, %v2217
        %2219 = vdwg.mxu0
        %vm2220 = vcmp.gt.f32.partialorder %v2173, 0.0
        %vm2221 = vcmp.gt.f32.partialorder %v2176, 0.0
        %vm2222 = vcmp.gt.f32.partialorder %v2179, 0.0
        %vm2223 = vcmp.gt.f32.partialorder %v2182, 0.0
        %vm2224 = vcmp.gt.f32.partialorder %v2185, 0.0
        %vm2225 = vcmp.gt.f32.partialorder %v2188, 0.0
        %vm2226 = vcmp.gt.f32.partialorder %v2191, 0.0
        %vm2227 = vcmp.gt.f32.partialorder %v2194, 0.0
        %vm2228 = vcmp.gt.f32.partialorder %v2197, 0.0
        %vm2229 = vcmp.gt.f32.partialorder %v2200, 0.0
        %vm2230 = vcmp.gt.f32.partialorder %v2203, 0.0
        %vm2231 = vcmp.gt.f32.partialorder %v2206, 0.0
        %vm2232 = vcmp.gt.f32.partialorder %v2209, 0.0
        %vm2233 = vcmp.gt.f32.partialorder %v2212, 0.0
        %vm2234 = vcmp.gt.f32.partialorder %v2215, 0.0
        %vm2235 = vcmp.gt.f32.partialorder %v2218, 0.0
        %v2236 = vmul.f32 %v2173, 0.2
        %v2237 = vmul.f32 %v2176, 0.2
        %v2238 = vmul.f32 %v2179, 0.2
        %v2239 = vmul.f32 %v2182, 0.2
        %v2240 = vmul.f32 %v2185, 0.2
        %v2241 = vmul.f32 %v2188, 0.2
        %v2242 = vmul.f32 %v2191, 0.2
        %v2243 = vmul.f32 %v2194, 0.2
        %v2244 = vmul.f32 %v2197, 0.2
        %v2245 = vmul.f32 %v2200, 0.2
        %v2246 = vmul.f32 %v2203, 0.2
        %v2247 = vmul.f32 %v2206, 0.2
        %v2248 = vmul.f32 %v2209, 0.2
        %v2249 = vmul.f32 %v2212, 0.2
        %v2250 = vmul.f32 %v2215, 0.2
        %v2251 = vmul.f32 %v2218, 0.2
        %v2252 = vsel %vm2220, %v2173, %v2236
        %v2253 = vsel %vm2221, %v2176, %v2237
        %v2254 = vsel %vm2222, %v2179, %v2238
        %v2255 = vsel %vm2223, %v2182, %v2239
        %v2256 = vsel %vm2224, %v2185, %v2240
        %v2257 = vsel %vm2225, %v2188, %v2241
        %v2258 = vsel %vm2226, %v2191, %v2242
        %v2259 = vsel %vm2227, %v2194, %v2243
        %v2260 = vsel %vm2228, %v2197, %v2244
        %v2261 = vsel %vm2229, %v2200, %v2245
        %v2262 = vsel %vm2230, %v2203, %v2246
        %v2263 = vsel %vm2231, %v2206, %v2247
        %v2264 = vsel %vm2232, %v2209, %v2248
        %v2265 = vsel %vm2233, %v2212, %v2249
        %v2266 = vsel %vm2234, %v2215, %v2250
        %v2267 = vsel %vm2235, %v2218, %v2251
        %v2268 = vld [vmem:[%s11] sm:$0xff]
        %v2269 = vld [vmem:[%s11 + $0x8] sm:$0xff]
        %v2270 = vld [vmem:[#allocation2] sm:$0x1]
        %v2287 = vrot.slane %v2252, 5
        %v2288 = vrot.slane %v2253, 5
        %v2289 = vsel %vm816, %v2287, %v2288
        %v2290 = vrot.slane %v2254, 5
        %v2291 = vsel %vm816, %v2288, %v2290
        %v2292 = vrot.slane %v2255, 5
        %v2293 = vsel %vm816, %v2290, %v2292
        %v2294 = vrot.slane %v2256, 5
        %v2295 = vsel %vm816, %v2292, %v2294
        %v2296 = vrot.slane %v2257, 5
        %v2297 = vsel %vm816, %v2294, %v2296
        %v2298 = vrot.slane %v2258, 5
        %v2299 = vsel %vm816, %v2296, %v2298
        %v2300 = vrot.slane %v2259, 5
        %v2301 = vsel %vm816, %v2298, %v2300
        %v2302 = vrot.slane %v2260, 5
        %v2303 = vsel %vm816, %v2300, %v2302
        %v2304 = vrot.slane %v2261, 5
        %v2305 = vsel %vm816, %v2302, %v2304
        %v2306 = vrot.slane %v2262, 5
        %v2307 = vsel %vm816, %v2304, %v2306
        %v2308 = vrot.slane %v2263, 5
        %v2309 = vsel %vm816, %v2306, %v2308
        %v2310 = vrot.slane %v2264, 5
        %v2311 = vsel %vm816, %v2308, %v2310
        %v2312 = vrot.slane %v2265, 5
        %v2313 = vsel %vm816, %v2310, %v2312
        %v2314 = vrot.slane %v2266, 5
        %v2315 = vsel %vm816, %v2312, %v2314
        %v2316 = vrot.slane %v2267, 5
        %v2317 = vsel %vm816, %v2314, %v2316
        %v2335 = vsel %vm816, 0.0, %v2287
        %v2336 = vsel %vm816, %v2316, 0.0
        %v2339 = vrot.slane %v2335, 1
        %v2340 = vrot.slane %v2289, 1
        %v2341 = vsel %vm845, %v2339, %v2340
        %v2342 = vrot.slane %v2291, 1
        %v2343 = vsel %vm845, %v2340, %v2342
        %v2344 = vrot.slane %v2293, 1
        %v2345 = vsel %vm845, %v2342, %v2344
        %v2346 = vrot.slane %v2295, 1
        %v2347 = vsel %vm845, %v2344, %v2346
        %v2348 = vrot.slane %v2297, 1
        %v2349 = vsel %vm845, %v2346, %v2348
        %v2350 = vrot.slane %v2299, 1
        %v2351 = vsel %vm845, %v2348, %v2350
        %v2352 = vrot.slane %v2301, 1
        %v2353 = vsel %vm845, %v2350, %v2352
        %v2354 = vrot.slane %v2303, 1
        %v2355 = vsel %vm845, %v2352, %v2354
        %v2356 = vrot.slane %v2305, 1
        %v2357 = vsel %vm845, %v2354, %v2356
        %v2358 = vrot.slane %v2307, 1
        %v2359 = vsel %vm845, %v2356, %v2358
        %v2360 = vrot.slane %v2309, 1
        %v2361 = vsel %vm845, %v2358, %v2360
        %v2362 = vrot.slane %v2311, 1
        %v2363 = vsel %vm845, %v2360, %v2362
        %v2364 = vrot.slane %v2313, 1
        %v2365 = vsel %vm845, %v2362, %v2364
        %v2366 = vrot.slane %v2315, 1
        %v2367 = vsel %vm845, %v2364, %v2366
        %v2368 = vrot.slane %v2317, 1
        %v2369 = vsel %vm845, %v2366, %v2368
        %v2370 = vrot.slane %v2336, 1
        %v2371 = vsel %vm845, %v2368, %v2370
        %2372 = vrot.lane.b32.xlu0 %v2341, 32
        %v2373 = vpop.permute.xlu0 %2372
        %2374 = vrot.lane.b32.xlu0 %v2343, 32
        %v2375 = vpop.permute.xlu0 %2374
        %2376 = vrot.lane.b32.xlu0 %v2345, 32
        %v2377 = vpop.permute.xlu0 %2376
        %2378 = vrot.lane.b32.xlu0 %v2347, 32
        %v2379 = vpop.permute.xlu0 %2378
        %2380 = vrot.lane.b32.xlu0 %v2349, 32
        %v2381 = vpop.permute.xlu0 %2380
        %2382 = vrot.lane.b32.xlu0 %v2351, 32
        %v2383 = vpop.permute.xlu0 %2382
        %2384 = vrot.lane.b32.xlu0 %v2353, 32
        %v2385 = vpop.permute.xlu0 %2384
        %2386 = vrot.lane.b32.xlu0 %v2355, 32
        %v2387 = vpop.permute.xlu0 %2386
        %2388 = vrot.lane.b32.xlu0 %v2357, 32
        %v2389 = vpop.permute.xlu0 %2388
        %2390 = vrot.lane.b32.xlu0 %v2359, 32
        %v2391 = vpop.permute.xlu0 %2390
        %2392 = vrot.lane.b32.xlu0 %v2361, 32
        %v2393 = vpop.permute.xlu0 %2392
        %2394 = vrot.lane.b32.xlu0 %v2363, 32
        %v2395 = vpop.permute.xlu0 %2394
        %2396 = vrot.lane.b32.xlu0 %v2365, 32
        %v2397 = vpop.permute.xlu0 %2396
        %2398 = vrot.lane.b32.xlu0 %v2367, 32
        %v2399 = vpop.permute.xlu0 %2398
        %2400 = vrot.lane.b32.xlu0 %v2369, 32
        %v2401 = vpop.permute.xlu0 %2400
        %2402 = vrot.lane.b32.xlu0 %v2371, 32
        %v2403 = vpop.permute.xlu0 %2402
        %v2420 = vrot.slane %v2335, 2
        %v2421 = vrot.slane %v2289, 2
        %v2422 = vsel %vm887, %v2420, %v2421
        %v2423 = vrot.slane %v2291, 2
        %v2424 = vsel %vm887, %v2421, %v2423
        %v2425 = vrot.slane %v2293, 2
        %v2426 = vsel %vm887, %v2423, %v2425
        %v2427 = vrot.slane %v2295, 2
        %v2428 = vsel %vm887, %v2425, %v2427
        %v2429 = vrot.slane %v2297, 2
        %v2430 = vsel %vm887, %v2427, %v2429
        %v2431 = vrot.slane %v2299, 2
        %v2432 = vsel %vm887, %v2429, %v2431
        %v2433 = vrot.slane %v2301, 2
        %v2434 = vsel %vm887, %v2431, %v2433
        %v2435 = vrot.slane %v2303, 2
        %v2436 = vsel %vm887, %v2433, %v2435
        %v2437 = vrot.slane %v2305, 2
        %v2438 = vsel %vm887, %v2435, %v2437
        %v2439 = vrot.slane %v2307, 2
        %v2440 = vsel %vm887, %v2437, %v2439
        %v2441 = vrot.slane %v2309, 2
        %v2442 = vsel %vm887, %v2439, %v2441
        %v2443 = vrot.slane %v2311, 2
        %v2444 = vsel %vm887, %v2441, %v2443
        %v2445 = vrot.slane %v2313, 2
        %v2446 = vsel %vm887, %v2443, %v2445
        %v2447 = vrot.slane %v2315, 2
        %v2448 = vsel %vm887, %v2445, %v2447
        %v2449 = vrot.slane %v2317, 2
        %v2450 = vsel %vm887, %v2447, %v2449
        %v2451 = vrot.slane %v2336, 2
        %v2452 = vsel %vm887, %v2449, %v2451
        %2453 = vrot.lane.b32.xlu0 %v2422, 64
        %v2454 = vpop.permute.xlu0 %2453
        %2455 = vrot.lane.b32.xlu0 %v2424, 64
        %v2456 = vpop.permute.xlu0 %2455
        %2457 = vrot.lane.b32.xlu0 %v2426, 64
        %v2458 = vpop.permute.xlu0 %2457
        %2459 = vrot.lane.b32.xlu0 %v2428, 64
        %v2460 = vpop.permute.xlu0 %2459
        %2461 = vrot.lane.b32.xlu0 %v2430, 64
        %v2462 = vpop.permute.xlu0 %2461
        %2463 = vrot.lane.b32.xlu0 %v2432, 64
        %v2464 = vpop.permute.xlu0 %2463
        %2465 = vrot.lane.b32.xlu0 %v2434, 64
        %v2466 = vpop.permute.xlu0 %2465
        %2467 = vrot.lane.b32.xlu0 %v2436, 64
        %v2468 = vpop.permute.xlu0 %2467
        %2469 = vrot.lane.b32.xlu0 %v2438, 64
        %v2470 = vpop.permute.xlu0 %2469
        %2471 = vrot.lane.b32.xlu0 %v2440, 64
        %v2472 = vpop.permute.xlu0 %2471
        %2473 = vrot.lane.b32.xlu0 %v2442, 64
        %v2474 = vpop.permute.xlu0 %2473
        %2475 = vrot.lane.b32.xlu0 %v2444, 64
        %v2476 = vpop.permute.xlu0 %2475
        %2477 = vrot.lane.b32.xlu0 %v2446, 64
        %v2478 = vpop.permute.xlu0 %2477
        %2479 = vrot.lane.b32.xlu0 %v2448, 64
        %v2480 = vpop.permute.xlu0 %2479
        %2481 = vrot.lane.b32.xlu0 %v2450, 64
        %v2482 = vpop.permute.xlu0 %2481
        %2483 = vrot.lane.b32.xlu0 %v2452, 64
        %v2484 = vpop.permute.xlu0 %2483
        %v2501 = vrot.slane %v2335, 3
        %v2502 = vrot.slane %v2289, 3
        %v2503 = vsel %vm929, %v2501, %v2502
        %v2504 = vrot.slane %v2291, 3
        %v2505 = vsel %vm929, %v2502, %v2504
        %v2506 = vrot.slane %v2293, 3
        %v2507 = vsel %vm929, %v2504, %v2506
        %v2508 = vrot.slane %v2295, 3
        %v2509 = vsel %vm929, %v2506, %v2508
        %v2510 = vrot.slane %v2297, 3
        %v2511 = vsel %vm929, %v2508, %v2510
        %v2512 = vrot.slane %v2299, 3
        %v2513 = vsel %vm929, %v2510, %v2512
        %v2514 = vrot.slane %v2301, 3
        %v2515 = vsel %vm929, %v2512, %v2514
        %v2516 = vrot.slane %v2303, 3
        %v2517 = vsel %vm929, %v2514, %v2516
        %v2518 = vrot.slane %v2305, 3
        %v2519 = vsel %vm929, %v2516, %v2518
        %v2520 = vrot.slane %v2307, 3
        %v2521 = vsel %vm929, %v2518, %v2520
        %v2522 = vrot.slane %v2309, 3
        %v2523 = vsel %vm929, %v2520, %v2522
        %v2524 = vrot.slane %v2311, 3
        %v2525 = vsel %vm929, %v2522, %v2524
        %v2526 = vrot.slane %v2313, 3
        %v2527 = vsel %vm929, %v2524, %v2526
        %v2528 = vrot.slane %v2315, 3
        %v2529 = vsel %vm929, %v2526, %v2528
        %v2530 = vrot.slane %v2317, 3
        %v2531 = vsel %vm929, %v2528, %v2530
        %v2532 = vrot.slane %v2336, 3
        %v2533 = vsel %vm929, %v2530, %v2532
        %2534 = vrot.lane.b32.xlu0 %v2503, 96
        %v2535 = vpop.permute.xlu0 %2534
        %2536 = vrot.lane.b32.xlu0 %v2505, 96
        %v2537 = vpop.permute.xlu0 %2536
        %2538 = vrot.lane.b32.xlu0 %v2507, 96
        %v2539 = vpop.permute.xlu0 %2538
        %2540 = vrot.lane.b32.xlu0 %v2509, 96
        %v2541 = vpop.permute.xlu0 %2540
        %2542 = vrot.lane.b32.xlu0 %v2511, 96
        %v2543 = vpop.permute.xlu0 %2542
        %2544 = vrot.lane.b32.xlu0 %v2513, 96
        %v2545 = vpop.permute.xlu0 %2544
        %2546 = vrot.lane.b32.xlu0 %v2515, 96
        %v2547 = vpop.permute.xlu0 %2546
        %2548 = vrot.lane.b32.xlu0 %v2517, 96
        %v2549 = vpop.permute.xlu0 %2548
        %2550 = vrot.lane.b32.xlu0 %v2519, 96
        %v2551 = vpop.permute.xlu0 %2550
        %2552 = vrot.lane.b32.xlu0 %v2521, 96
        %v2553 = vpop.permute.xlu0 %2552
        %2554 = vrot.lane.b32.xlu0 %v2523, 96
        %v2555 = vpop.permute.xlu0 %2554
        %2556 = vrot.lane.b32.xlu0 %v2525, 96
        %v2557 = vpop.permute.xlu0 %2556
        %2558 = vrot.lane.b32.xlu0 %v2527, 96
        %v2559 = vpop.permute.xlu0 %2558
        %2560 = vrot.lane.b32.xlu0 %v2529, 96
        %v2561 = vpop.permute.xlu0 %2560
        %2562 = vrot.lane.b32.xlu0 %v2531, 96
        %v2563 = vpop.permute.xlu0 %2562
        %2564 = vrot.lane.b32.xlu0 %v2533, 96
        %v2565 = vpop.permute.xlu0 %2564
        %v2582 = vrot.slane %v2335, 4
        %v2583 = vrot.slane %v2289, 4
        %v2584 = vsel %vm971, %v2582, %v2583
        %v2585 = vrot.slane %v2291, 4
        %v2586 = vsel %vm971, %v2583, %v2585
        %v2587 = vrot.slane %v2293, 4
        %v2588 = vsel %vm971, %v2585, %v2587
        %v2589 = vrot.slane %v2295, 4
        %v2590 = vsel %vm971, %v2587, %v2589
        %v2591 = vrot.slane %v2297, 4
        %v2592 = vsel %vm971, %v2589, %v2591
        %v2593 = vrot.slane %v2299, 4
        %v2594 = vsel %vm971, %v2591, %v2593
        %v2595 = vrot.slane %v2301, 4
        %v2596 = vsel %vm971, %v2593, %v2595
        %v2597 = vrot.slane %v2303, 4
        %v2598 = vsel %vm971, %v2595, %v2597
        %v2599 = vrot.slane %v2305, 4
        %v2600 = vsel %vm971, %v2597, %v2599
        %v2601 = vrot.slane %v2307, 4
        %v2602 = vsel %vm971, %v2599, %v2601
        %v2603 = vrot.slane %v2309, 4
        %v2604 = vsel %vm971, %v2601, %v2603
        %v2605 = vrot.slane %v2311, 4
        %v2606 = vsel %vm971, %v2603, %v2605
        %v2607 = vrot.slane %v2313, 4
        %v2608 = vsel %vm971, %v2605, %v2607
        %v2609 = vrot.slane %v2315, 4
        %v2610 = vsel %vm971, %v2607, %v2609
        %v2611 = vrot.slane %v2317, 4
        %v2612 = vsel %vm971, %v2609, %v2611
        %v2613 = vrot.slane %v2336, 4
        %v2614 = vsel %vm971, %v2611, %v2613
        %v2631 = vrot.slane %v2335, 5
        %v2632 = vrot.slane %v2289, 5
        %v2633 = vsel %vm816, %v2631, %v2632
        %v2634 = vrot.slane %v2291, 5
        %v2635 = vsel %vm816, %v2632, %v2634
        %v2636 = vrot.slane %v2293, 5
        %v2637 = vsel %vm816, %v2634, %v2636
        %v2638 = vrot.slane %v2295, 5
        %v2639 = vsel %vm816, %v2636, %v2638
        %v2640 = vrot.slane %v2297, 5
        %v2641 = vsel %vm816, %v2638, %v2640
        %v2642 = vrot.slane %v2299, 5
        %v2643 = vsel %vm816, %v2640, %v2642
        %v2644 = vrot.slane %v2301, 5
        %v2645 = vsel %vm816, %v2642, %v2644
        %v2646 = vrot.slane %v2303, 5
        %v2647 = vsel %vm816, %v2644, %v2646
        %v2648 = vrot.slane %v2305, 5
        %v2649 = vsel %vm816, %v2646, %v2648
        %v2650 = vrot.slane %v2307, 5
        %v2651 = vsel %vm816, %v2648, %v2650
        %v2652 = vrot.slane %v2309, 5
        %v2653 = vsel %vm816, %v2650, %v2652
        %v2654 = vrot.slane %v2311, 5
        %v2655 = vsel %vm816, %v2652, %v2654
        %v2656 = vrot.slane %v2313, 5
        %v2657 = vsel %vm816, %v2654, %v2656
        %v2658 = vrot.slane %v2315, 5
        %v2659 = vsel %vm816, %v2656, %v2658
        %v2660 = vrot.slane %v2317, 5
        %v2661 = vsel %vm816, %v2658, %v2660
        %v2662 = vrot.slane %v2336, 5
        %v2663 = vsel %vm816, %v2660, %v2662
        %2664 = vrot.lane.b32.xlu0 %v2633, 32
        %v2665 = vpop.permute.xlu0 %2664
        %2666 = vrot.lane.b32.xlu0 %v2635, 32
        %v2667 = vpop.permute.xlu0 %2666
        %2668 = vrot.lane.b32.xlu0 %v2637, 32
        %v2669 = vpop.permute.xlu0 %2668
        %2670 = vrot.lane.b32.xlu0 %v2639, 32
        %v2671 = vpop.permute.xlu0 %2670
        %2672 = vrot.lane.b32.xlu0 %v2641, 32
        %v2673 = vpop.permute.xlu0 %2672
        %2674 = vrot.lane.b32.xlu0 %v2643, 32
        %v2675 = vpop.permute.xlu0 %2674
        %2676 = vrot.lane.b32.xlu0 %v2645, 32
        %v2677 = vpop.permute.xlu0 %2676
        %2678 = vrot.lane.b32.xlu0 %v2647, 32
        %v2679 = vpop.permute.xlu0 %2678
        %2680 = vrot.lane.b32.xlu0 %v2649, 32
        %v2681 = vpop.permute.xlu0 %2680
        %2682 = vrot.lane.b32.xlu0 %v2651, 32
        %v2683 = vpop.permute.xlu0 %2682
        %2684 = vrot.lane.b32.xlu0 %v2653, 32
        %v2685 = vpop.permute.xlu0 %2684
        %2686 = vrot.lane.b32.xlu0 %v2655, 32
        %v2687 = vpop.permute.xlu0 %2686
        %2688 = vrot.lane.b32.xlu0 %v2657, 32
        %v2689 = vpop.permute.xlu0 %2688
        %2690 = vrot.lane.b32.xlu0 %v2659, 32
        %v2691 = vpop.permute.xlu0 %2690
        %2692 = vrot.lane.b32.xlu0 %v2661, 32
        %v2693 = vpop.permute.xlu0 %2692
        %2694 = vrot.lane.b32.xlu0 %v2663, 32
        %v2695 = vpop.permute.xlu0 %2694
        %v2712 = vrot.slane %v2335, 6
        %v2713 = vrot.slane %v2289, 6
        %v2714 = vsel %vm1038, %v2712, %v2713
        %v2715 = vrot.slane %v2291, 6
        %v2716 = vsel %vm1038, %v2713, %v2715
        %v2717 = vrot.slane %v2293, 6
        %v2718 = vsel %vm1038, %v2715, %v2717
        %v2719 = vrot.slane %v2295, 6
        %v2720 = vsel %vm1038, %v2717, %v2719
        %v2721 = vrot.slane %v2297, 6
        %v2722 = vsel %vm1038, %v2719, %v2721
        %v2723 = vrot.slane %v2299, 6
        %v2724 = vsel %vm1038, %v2721, %v2723
        %v2725 = vrot.slane %v2301, 6
        %v2726 = vsel %vm1038, %v2723, %v2725
        %v2727 = vrot.slane %v2303, 6
        %v2728 = vsel %vm1038, %v2725, %v2727
        %v2729 = vrot.slane %v2305, 6
        %v2730 = vsel %vm1038, %v2727, %v2729
        %v2731 = vrot.slane %v2307, 6
        %v2732 = vsel %vm1038, %v2729, %v2731
        %v2733 = vrot.slane %v2309, 6
        %v2734 = vsel %vm1038, %v2731, %v2733
        %v2735 = vrot.slane %v2311, 6
        %v2736 = vsel %vm1038, %v2733, %v2735
        %v2737 = vrot.slane %v2313, 6
        %v2738 = vsel %vm1038, %v2735, %v2737
        %v2739 = vrot.slane %v2315, 6
        %v2740 = vsel %vm1038, %v2737, %v2739
        %v2741 = vrot.slane %v2317, 6
        %v2742 = vsel %vm1038, %v2739, %v2741
        %v2743 = vrot.slane %v2336, 6
        %v2744 = vsel %vm1038, %v2741, %v2743
        %2745 = vrot.lane.b32.xlu0 %v2714, 64
        %v2746 = vpop.permute.xlu0 %2745
        %2747 = vrot.lane.b32.xlu0 %v2716, 64
        %v2748 = vpop.permute.xlu0 %2747
        %2749 = vrot.lane.b32.xlu0 %v2718, 64
        %v2750 = vpop.permute.xlu0 %2749
        %2751 = vrot.lane.b32.xlu0 %v2720, 64
        %v2752 = vpop.permute.xlu0 %2751
        %2753 = vrot.lane.b32.xlu0 %v2722, 64
        %v2754 = vpop.permute.xlu0 %2753
        %2755 = vrot.lane.b32.xlu0 %v2724, 64
        %v2756 = vpop.permute.xlu0 %2755
        %2757 = vrot.lane.b32.xlu0 %v2726, 64
        %v2758 = vpop.permute.xlu0 %2757
        %2759 = vrot.lane.b32.xlu0 %v2728, 64
        %v2760 = vpop.permute.xlu0 %2759
        %2761 = vrot.lane.b32.xlu0 %v2730, 64
        %v2762 = vpop.permute.xlu0 %2761
        %2763 = vrot.lane.b32.xlu0 %v2732, 64
        %v2764 = vpop.permute.xlu0 %2763
        %2765 = vrot.lane.b32.xlu0 %v2734, 64
        %v2766 = vpop.permute.xlu0 %2765
        %2767 = vrot.lane.b32.xlu0 %v2736, 64
        %v2768 = vpop.permute.xlu0 %2767
        %2769 = vrot.lane.b32.xlu0 %v2738, 64
        %v2770 = vpop.permute.xlu0 %2769
        %2771 = vrot.lane.b32.xlu0 %v2740, 64
        %v2772 = vpop.permute.xlu0 %2771
        %2773 = vrot.lane.b32.xlu0 %v2742, 64
        %v2774 = vpop.permute.xlu0 %2773
        %2775 = vrot.lane.b32.xlu0 %v2744, 64
        %v2776 = vpop.permute.xlu0 %2775
        %v2793 = vsel %vm486, %v2335, %v2373
        %v2794 = vsel %vm486, %v2289, %v2375
        %v2795 = vsel %vm486, %v2291, %v2377
        %v2796 = vsel %vm486, %v2293, %v2379
        %v2797 = vsel %vm486, %v2295, %v2381
        %v2798 = vsel %vm486, %v2297, %v2383
        %v2799 = vsel %vm486, %v2299, %v2385
        %v2800 = vsel %vm486, %v2301, %v2387
        %v2801 = vsel %vm486, %v2303, %v2389
        %v2802 = vsel %vm486, %v2305, %v2391
        %v2803 = vsel %vm486, %v2307, %v2393
        %v2804 = vsel %vm486, %v2309, %v2395
        %v2805 = vsel %vm486, %v2311, %v2397
        %v2806 = vsel %vm486, %v2313, %v2399
        %v2807 = vsel %vm486, %v2315, %v2401
        %v2808 = vsel %vm486, %v2317, %v2403
        %v2809 = vsel %vm1088, %v2793, %v2454
        %v2810 = vsel %vm1088, %v2794, %v2456
        %v2811 = vsel %vm1088, %v2795, %v2458
        %v2812 = vsel %vm1088, %v2796, %v2460
        %v2813 = vsel %vm1088, %v2797, %v2462
        %v2814 = vsel %vm1088, %v2798, %v2464
        %v2815 = vsel %vm1088, %v2799, %v2466
        %v2816 = vsel %vm1088, %v2800, %v2468
        %v2817 = vsel %vm1088, %v2801, %v2470
        %v2818 = vsel %vm1088, %v2802, %v2472
        %v2819 = vsel %vm1088, %v2803, %v2474
        %v2820 = vsel %vm1088, %v2804, %v2476
        %v2821 = vsel %vm1088, %v2805, %v2478
        %v2822 = vsel %vm1088, %v2806, %v2480
        %v2823 = vsel %vm1088, %v2807, %v2482
        %v2824 = vsel %vm1088, %v2808, %v2484
        %v2825 = vsel %vm1097, %v2809, %v2535
        %v2826 = vsel %vm1097, %v2810, %v2537
        %v2827 = vsel %vm1097, %v2811, %v2539
        %v2828 = vsel %vm1097, %v2812, %v2541
        %v2829 = vsel %vm1097, %v2813, %v2543
        %v2830 = vsel %vm1097, %v2814, %v2545
        %v2831 = vsel %vm1097, %v2815, %v2547
        %v2832 = vsel %vm1097, %v2816, %v2549
        %v2833 = vsel %vm1097, %v2817, %v2551
        %v2834 = vsel %vm1097, %v2818, %v2553
        %v2835 = vsel %vm1097, %v2819, %v2555
        %v2836 = vsel %vm1097, %v2820, %v2557
        %v2837 = vsel %vm1097, %v2821, %v2559
        %v2838 = vsel %vm1097, %v2822, %v2561
        %v2839 = vsel %vm1097, %v2823, %v2563
        %v2840 = vsel %vm1097, %v2824, %v2565
        %v2841 = vsel %vm486, %v2584, %v2665
        %v2842 = vsel %vm486, %v2586, %v2667
        %v2843 = vsel %vm486, %v2588, %v2669
        %v2844 = vsel %vm486, %v2590, %v2671
        %v2845 = vsel %vm486, %v2592, %v2673
        %v2846 = vsel %vm486, %v2594, %v2675
        %v2847 = vsel %vm486, %v2596, %v2677
        %v2848 = vsel %vm486, %v2598, %v2679
        %v2849 = vsel %vm486, %v2600, %v2681
        %v2850 = vsel %vm486, %v2602, %v2683
        %v2851 = vsel %vm486, %v2604, %v2685
        %v2852 = vsel %vm486, %v2606, %v2687
        %v2853 = vsel %vm486, %v2608, %v2689
        %v2854 = vsel %vm486, %v2610, %v2691
        %v2855 = vsel %vm486, %v2612, %v2693
        %v2856 = vsel %vm486, %v2614, %v2695
        %v2857 = vsel %vm1088, %v2841, %v2746
        %v2858 = vsel %vm1088, %v2842, %v2748
        %v2859 = vsel %vm1088, %v2843, %v2750
        %v2860 = vsel %vm1088, %v2844, %v2752
        %v2861 = vsel %vm1088, %v2845, %v2754
        %v2862 = vsel %vm1088, %v2846, %v2756
        %v2863 = vsel %vm1088, %v2847, %v2758
        %v2864 = vsel %vm1088, %v2848, %v2760
        %v2865 = vsel %vm1088, %v2849, %v2762
        %v2866 = vsel %vm1088, %v2850, %v2764
        %v2867 = vsel %vm1088, %v2851, %v2766
        %v2868 = vsel %vm1088, %v2852, %v2768
        %v2869 = vsel %vm1088, %v2853, %v2770
        %v2870 = vsel %vm1088, %v2854, %v2772
        %v2871 = vsel %vm1088, %v2855, %v2774
        %v2872 = vsel %vm1088, %v2856, %v2776
        %v2874 = vsel %vm1097, %v2269, 0
        %v2877 = vsel %vm1097, %v2857, 0
        %v2880 = vsel %vm1097, %v2858, 0
        %v2883 = vsel %vm1097, %v2859, 0
        %v2886 = vsel %vm1097, %v2860, 0
        %v2889 = vsel %vm1097, %v2861, 0
        %v2892 = vsel %vm1097, %v2862, 0
        %v2895 = vsel %vm1097, %v2863, 0
        %v2898 = vsel %vm1097, %v2864, 0
        %v2901 = vsel %vm1097, %v2865, 0
        %v2904 = vsel %vm1097, %v2866, 0
        %v2907 = vsel %vm1097, %v2867, 0
        %v2910 = vsel %vm1097, %v2868, 0
        %v2913 = vsel %vm1097, %v2869, 0
        %v2916 = vsel %vm1097, %v2870, 0
        %v2919 = vsel %vm1097, %v2871, 0
        %v2922 = vsel %vm1097, %v2872, 0
        %2924 = vmatpush.xpose.msra.mxu0 %v2840
        %2925 = vmatpush.xpose.msra.mxu0 %v2839
        %2926 = vmatpush.xpose.msra.mxu0 %v2838
        %2927 = vmatpush.xpose.msra.mxu0 %v2837
        %2928 = vmatpush.xpose.msra.mxu0 %v2836
        %2929 = vmatpush.xpose.msra.mxu0 %v2835
        %2930 = vmatpush.xpose.msra.mxu0 %v2834
        %2931 = vmatpush.xpose.msra.mxu0 %v2833
        %2932 = vmatpush.xpose.msra.mxu0 %v2832
        %2933 = vmatpush.xpose.msra.mxu0 %v2831
        %2934 = vmatpush.xpose.msra.mxu0 %v2830
        %2935 = vmatpush.xpose.msra.mxu0 %v2829
        %2936 = vmatpush.xpose.msra.mxu0 %v2828
        %2937 = vmatpush.xpose.msra.mxu0 %v2827
        %2938 = vmatpush.xpose.msra.mxu0 %v2826
        %2939 = vmatpush.xpose.msra.mxu0 %v2825
        %2940 = vmatmul.f32.gmra.mxu0 %v2268
        %v2941 = vpop.f32.mrf.mxu0
        %v2942 = vadd.f32 0.0, %v2941
        %2943 = vdwg.mxu0
        %2944 = vmatpush.xpose.msra.mxu0 %v2922
        %2945 = vmatpush.xpose.msra.mxu0 %v2919
        %2946 = vmatpush.xpose.msra.mxu0 %v2916
        %2947 = vmatpush.xpose.msra.mxu0 %v2913
        %2948 = vmatpush.xpose.msra.mxu0 %v2910
        %2949 = vmatpush.xpose.msra.mxu0 %v2907
        %2950 = vmatpush.xpose.msra.mxu0 %v2904
        %2951 = vmatpush.xpose.msra.mxu0 %v2901
        %2952 = vmatpush.xpose.msra.mxu0 %v2898
        %2953 = vmatpush.xpose.msra.mxu0 %v2895
        %2954 = vmatpush.xpose.msra.mxu0 %v2892
        %2955 = vmatpush.xpose.msra.mxu0 %v2889
        %2956 = vmatpush.xpose.msra.mxu0 %v2886
        %2957 = vmatpush.xpose.msra.mxu0 %v2883
        %2958 = vmatpush.xpose.msra.mxu0 %v2880
        %2959 = vmatpush.xpose.msra.mxu0 %v2877
        %2960 = vmatmul.f32.gmra.mxu0 %v2874
        %v2961 = vpop.f32.mrf.mxu0
        %v2962 = vadd.f32 %v2942, %v2961
        %2963 = vdwg.mxu0
        %2965 = vset.pattern.permute.xlu0 0
        %2966 = vperm.xlu0 %2965, %v2270
        %v2967 = vpop.permute.xlu0 %2966
        %v2969 = vperm.slane %v2967, 0
        %v2970 = vadd.f32 %v2962, %v2969
        %2971 = vst [vmem:[%s468] sm:$0x1] %v2970
        %s2972 = sand.u32 %s317, 1
        %s2973 = scalar_lea.sflag [#allocation5], %s2972
        %s2974 = sand.u32 %s317, 1
        %s2975 = scalar_lea.vmem [#allocation8], %s2974
        // Predicated region
        $region81: #{conv_band_decoder_forward.1} parent=71 // pred_check
          %p2976 = pneg %p327
        $region82: #{conv_band_decoder_forward.1} parent=71 // pred_check_branch
          %2978 = sbr.rel (%p2976) target = $region84
        $region83: #{conv_band_decoder_forward.1} parent=71 // pred_region
          %2980 = vsyncadd %s2973, 0
          %s2981 = scalar_lea.hbm %s13, %s31
          %s2983 = sshll.u32 %s2975, 4
          %s2984 = int_to_ptr.vmem [resolvable:$true] %s2983
          %s2985 = sshll.u32 %s2981, 4
          %s2986 = int_to_ptr.hbm [resolvable:$true] %s2985
          %2988 = dma.vmem_to_hbm [thread:$0]  %s2984, 16, %s2986, %s2973
        $region84: #{conv_band_decoder_forward.1} parent=71 // pred_fallthru
          _
      $region72: #{conv_band_decoder_forward.1} parent=5 // pred_fallthru
        _
      %p2989 = scmp.le.s32.totalorder 2, %s26
      // Predicated region
      $region85: #{conv_band_decoder_forward.1} parent=5 // pred_check
        %p2990 = pneg %p2989
      $region86: #{conv_band_decoder_forward.1} parent=5 // pred_check_branch
        %2992 = sbr.rel (%p2990) target = $region88
      $region87: #{conv_band_decoder_forward.1} parent=5 // pred_region
        %s2993 = ssub.s32 %s26, 2
        // Predicated region
        $region89: #{conv_band_decoder_forward.1} parent=87 // pred_check
          %p2994 = pneg %p333
        $region90: #{conv_band_decoder_forward.1} parent=87 // pred_check_branch
          %2996 = sbr.rel (%p2994) target = $region92
        $region91: #{conv_band_decoder_forward.1} parent=87 // pred_region
          %s2997 = sand.u32 %s318, 1
          %s2998 = scalar_lea.sflag [#allocation5], %s2997
          %s2999 = sand.u32 %s318, 1
          %s3000 = scalar_lea.vmem [#allocation8], %s2999
          %3002 = dma.done %s2998, 16
        $region92: #{conv_band_decoder_forward.1} parent=87 // pred_fallthru
          _
      $region88: #{conv_band_decoder_forward.1} parent=5 // pred_fallthru
        _
    $region6: #{conv_band_decoder_forward.1} parent=1 // loop_footer
      %s30 = sadd.s32 1, %s26
    $region7: #{conv_band_decoder_forward.1} parent=1 // loop_footer_branch
      %25 = sbr.rel target = $region3
    $region8: #{conv_band_decoder_forward.1} parent=1 // loop_exit
      _
    %3003 = vsyncpa [#allocation4], 1
    %s3004 = scalar_lea.sflag [#allocation4], 1
    %3005 = vsyncpa %s3004, 1
    %3006 = vsyncpa [#allocation7], 1
    %3007 = vsyncpa [#allocation5], 1
    %s3008 = scalar_lea.sflag [#allocation5], 1
    %3009 = vsyncpa %s3008, 1

</llo_original>
